<compile_context>
chip_gen: v7x
topology: tpu7x:2x2x1
jax: 0.10.0
libtpu: 0.0.40
codegen_flags: <defaults>
</compile_context>

<pallas_src>
import functools

import jax
import jax.numpy as jnp
from jax.experimental import pallas as pl
from jax.experimental.pallas import tpu as pltpu


def _round_up(x, m):
    return ((x + m - 1) // m) * m


def tabular_kernel(x_ref, win_ref, wgd_ref, bg_ref, wd2_ref, bd_ref, wo_ref,
                   bo_ref, out_ref, *, n_blocks, feat, zrows, col_offsets,
                   cont_row, ones_row):
    """Fused embedding + 5 gated-residual blocks + output head.

    x_ref   : (C, TB)  int32  raw indices, batch on the lane axis (C = 4 cols)
    win_ref : (F, Z)   bf16   fused [embedding tables | last_dense w | b]
    wgd_ref : (2F, F)  bf16   [W_gate ; W_dense[:, :F]]   (PyTorch (out,in))
    bg_ref  : (F, 1)   f32    gate bias
    wd2_ref : (F, F)   bf16   W_dense[:, F:]   (acts on h * gate)
    bd_ref  : (F, 1)   f32    dense bias
    wo_ref  : (1, F)   f32    output head (10 identical heads + mean == 1 head)
    bo_ref  : (1, 1)   f32    output head bias
    out_ref : (1, TB)  f32    lane-dense result row
    """
    tb = x_ref.shape[-1]
    xb = x_ref[...]                                             # (C, TB) int32

    # Feature matrix Z (zrows, TB):
    #   rows [off_j, off_j + dim_j) : one-hot of index column j (disjoint ranges)
    #   row cont_row               : float(last column)  (last_dense input)
    #   row ones_row               : 1.0                 (last_dense bias)
    row = jax.lax.broadcasted_iota(jnp.int32, (zrows, tb), 0)
    hot = row == (xb[0:1, :] + col_offsets[0])
    for j in range(1, len(col_offsets)):
        hot = hot | (row == (xb[j:j + 1, :] + col_offsets[j]))
    cont = xb[-1:, :].astype(jnp.float32)                       # (1, TB)
    z = hot.astype(jnp.float32)
    z = z + jnp.where(row == cont_row, cont, 0.0)
    z = z + (row == ones_row).astype(jnp.float32)

    # h0 = concat(embeddings, last_dense(x[:, -1])) as one MXU matmul.
    h = jnp.dot(win_ref[...], z.astype(jnp.bfloat16),
                preferred_element_type=jnp.float32)             # (F, TB) f32

    # Hoisted bias broadcasts (JAX does not CSE broadcast_in_dim in the loop).
    bg_b = jnp.broadcast_to(bg_ref[...], (feat, tb))
    bd_b = jnp.broadcast_to(bd_ref[...], (feat, tb))
    wgd = wgd_ref[...]                                          # (2F, F) bf16
    wd2 = wd2_ref[...]                                          # (F, F)  bf16

    for _ in range(n_blocks):
        # TODO(synk): nn.Dropout(0.2) is stochastic in train mode; this is the
        # eval-mode identity.
        gd = jnp.dot(wgd, h.astype(jnp.bfloat16),
                     preferred_element_type=jnp.float32)        # (2F, TB) f32
        gate = jax.nn.sigmoid(gd[:feat] + bg_b)                 # f32 elementwise
        gated = h * gate
        # dense(concat([h, gated])) == Wd1 @ h + Wd2 @ gated + bd.
        # (If bundle dumps ever show ld/st-slot-bound spills at large TB, split
        #  the fused wgd matmul so gd's gate half dies before the wd2 matmul.)
        h = h + gd[feat:] + bd_b + jnp.dot(wd2, gated.astype(jnp.bfloat16),
                                           preferred_element_type=jnp.float32)

    out_ref[...] = (jnp.dot(wo_ref[...], h, preferred_element_type=jnp.float32)
                    + bo_ref[...])


def init_params(key, input_dims, start_neurons):
    s = start_neurons
    n = len(input_dims)
    f = s * (n + 1)                        # concatenated feature width (5*S)
    keys = jax.random.split(key, 12)

    def rnd(k, shape, scale=0.1):
        return (scale * jax.random.normal(k, shape)).astype(jnp.float32)

    return {
        # nn.Embedding(dim, S) tables, one per input column
        "emb": [rnd(jax.random.fold_in(keys[0], i), (input_dims[i], s))
                for i in range(n)],
        # nn.Linear(1, S) "last_dense" — stored (in, out) for the JAX glue
        "w_le": rnd(keys[1], (1, s)),
        "b_le": rnd(keys[2], (s,)),
        # shared middle_layers[0]: Linear(F, F) gate — PyTorch (out, in) layout
        "wg": rnd(keys[3], (f, f)),
        "bg": rnd(keys[4], (f,)),
        # shared middle_layers[2]: Linear(2F, F) dense — PyTorch (out, in) layout
        "wd": rnd(keys[5], (f, 2 * f)),
        "bd": rnd(keys[6], (f,)),
        # output_layer: Linear(F, 1) — PyTorch (out, in) layout
        "wo": rnd(keys[7], (1, f)),
        "bo": rnd(keys[8], (1,)),
    }


def tabular_forward(x, params, input_dims, start_neurons, *, block_b=4096):
    s = start_neurons
    n = len(input_dims)
    f = s * (n + 1)
    n_blocks = 5

    # ---- batch tiling -------------------------------------------------------
    b = x.shape[0]
    b_pad = _round_up(b, 128)                              # lane granularity
    max_tb = max(128, min(_round_up(block_b, 128), b_pad))
    min_steps = 2 if b_pad >= 256 else 1                   # keep both v7x TCs busy
    n_steps = max(min_steps, pl.cdiv(b_pad, max_tb))
    tb = _round_up(pl.cdiv(b_pad, n_steps), 128)           # exact tiling, big tiles
    b_cover = n_steps * tb                                  # residual pad < 128/step

    # Only the raw int32 indices travel through HBM (16 B/column): transpose so
    # batch is on the lane axis and pad with index 0 (valid, outputs discarded).
    x_t = jnp.pad(x.astype(jnp.int32).T, ((0, 0), (0, b_cover - b)))   # (n, b_cover)

    # ---- fused input-embedding matrix W_in (F, Z) ---------------------------
    offs, off = [], 0
    for d in input_dims:
        offs.append(off)
        off += d
    cont_col, ones_col = off, off + 1
    zrows = _round_up(off + 2, 8)

    w_in = jnp.zeros((f, zrows), jnp.float32)
    for i, d in enumerate(input_dims):
        w_in = w_in.at[i * s:(i + 1) * s, offs[i]:offs[i] + d].set(
            params["emb"][i].T)
    w_in = w_in.at[n * s:(n + 1) * s, cont_col].set(params["w_le"][0])
    w_in = w_in.at[n * s:(n + 1) * s, ones_col].set(params["b_le"])

    # ---- weight preprocessing: fuse gate + dense-1; bf16 matmul operands ----
    wd1 = params["wd"][:, :f]                               # acts on h
    wd2 = params["wd"][:, f:]                               # acts on h*gate
    w_in_b = w_in.astype(jnp.bfloat16)
    wgd_b = jnp.concatenate([params["wg"], wd1], axis=0).astype(jnp.bfloat16)
    wd2_b = wd2.astype(jnp.bfloat16)
    bg_c = params["bg"][:, None]                            # (F, 1) f32
    bd_c = params["bd"][:, None]                            # (F, 1) f32
    wo_c = params["wo"]                                     # (1, F) f32 head
    bo_c = params["bo"][:, None]                            # (1, 1) f32

    flops_per_col = 2 * f * zrows + n_blocks * (2 * (2 * f) * f + 2 * f * f) + 2 * f
    weight_bytes = 2 * (w_in_b.size + wgd_b.size + wd2_b.size) + 4 * (f + wo_c.size + f + 1)
    cost = pl.CostEstimate(
        flops=int(b_cover * flops_per_col),
        transcendentals=int(b_cover * n_blocks * f),
        bytes_accessed=int(4 * n * b_cover + 4 * b_cover + weight_bytes),
    )

    out = pl.pallas_call(
        functools.partial(tabular_kernel, n_blocks=n_blocks, feat=f,
                          zrows=zrows, col_offsets=tuple(offs),
                          cont_row=cont_col, ones_row=ones_col),
        out_shape=jax.ShapeDtypeStruct((1, b_cover), jnp.float32),
        grid=(n_steps,),
        in_specs=[
            pl.BlockSpec((n, tb), lambda i: (0, i)),        # int32 indices, tiled on batch
            pl.BlockSpec((f, zrows), lambda i: (0, 0)),     # fused embedding matrix
            pl.BlockSpec((2 * f, f), lambda i: (0, 0)),     # fused gate/dense1 weight
            pl.BlockSpec((f, 1), lambda i: (0, 0)),         # gate bias
            pl.BlockSpec((f, f), lambda i: (0, 0)),         # dense2 weight
            pl.BlockSpec((f, 1), lambda i: (0, 0)),         # dense bias
            pl.BlockSpec((1, f), lambda i: (0, 0)),         # output head weight
            pl.BlockSpec((1, 1), lambda i: (0, 0)),         # output head bias
        ],
        out_specs=pl.BlockSpec((1, tb), lambda i: (0, i)),  # lane-dense output row
        compiler_params=pltpu.CompilerParams(
            dimension_semantics=("parallel",)),
        cost_estimate=cost,
    )(x_t, w_in_b, wgd_b, bg_c, wd2_b, bd_c, wo_c, bo_c)

    return out[0, :b][:, None]                              # (B, 1)


def reference_forward(x, params, input_dims, start_neurons):
    """Pure-JAX f32 reference mirroring the PyTorch forward (eval mode)."""
    n = len(input_dims)
    embs = [jnp.take(params["emb"][i], x[:, i], axis=0) for i in range(n)]
    cont = x[:, -1].astype(jnp.float32)[:, None]
    embs.append(cont @ params["w_le"] + params["b_le"])
    h = jnp.concatenate(embs, axis=1).astype(jnp.float32)
    for _ in range(5):
        g = jax.nn.sigmoid(h @ params["wg"].T + params["bg"])
        gated = h * g
        hc = jnp.concatenate([h, gated], axis=1)
        h = h + (hc @ params["wd"].T + params["bd"])
    heads = jnp.stack([h @ params["wo"].T + params["bo"] for _ in range(10)],
                      axis=1)                               # (B, 10, 1)
    return jnp.mean(heads, axis=1)                          # (B, 1)


def reference_forward_bf16(x, params, input_dims, start_neurons):
    """Reference mirroring the kernel's math: bf16 matmul operands, f32 accum,
    f32 elementwise (for a tight numerical check of the Pallas kernel)."""
    n = len(input_dims)
    bf = lambda a: a.astype(jnp.bfloat16)
    embs = [jnp.take(bf(params["emb"][i]).astype(jnp.float32), x[:, i], axis=0)
            for i in range(n)]
    cont = x[:, -1].astype(jnp.float32)[:, None]
    embs.append(cont * bf(params["w_le"]).astype(jnp.float32)
                + bf(params["b_le"]).astype(jnp.float32))
    h = jnp.concatenate(embs, axis=1)
    wg, wd = bf(params["wg"]), bf(params["wd"])
    for _ in range(5):
        g = jax.nn.sigmoid(jnp.dot(bf(h), wg.T, preferred_element_type=jnp.float32)
                           + params["bg"])
        gated = h * g
        hc = jnp.concatenate([bf(h), bf(gated)], axis=1)
        h = h + jnp.dot(hc, wd.T, preferred_element_type=jnp.float32) + params["bd"]
    return h @ params["wo"].T + params["bo"]               # (B, 1)


if __name__ == "__main__":
    input_dims = [6, 7, 3, 13]
    start_neurons = 8                       # F = 8 * 5 = 40

    key = jax.random.PRNGKey(0)
    pkey, xkey = jax.random.split(key)
    params = init_params(pkey, input_dims, start_neurons)

    # Small single-tile batch and a multi-tile batch (exercises the grid, the
    # >=2-step split for v7x, and the lane padding).
    for batch in (16, 300):
        cols = [jax.random.randint(jax.random.fold_in(xkey, 10 * batch + i),
                                   (batch, 1), 0, d)
                for i, d in enumerate(input_dims)]
        x = jnp.concatenate(cols, axis=1).astype(jnp.int32)       # (B, 4)

        out = tabular_forward(x, params, input_dims, start_neurons)
        out = jax.block_until_ready(out)
        assert out.shape == (batch, 1), out.shape
        assert bool(jnp.all(jnp.isfinite(out)))

        # Tight check against a reference using the same bf16 operand casts.
        ref_bf = reference_forward_bf16(x, params, input_dims, start_neurons)
        assert jnp.allclose(out, ref_bf, atol=1e-3, rtol=1e-3), (
            float(jnp.max(jnp.abs(out - ref_bf))))
        # Looser check against the full-f32 reference (bf16 MXU operand error).
        ref_f32 = reference_forward(x, params, input_dims, start_neurons)
        assert jnp.allclose(out, ref_f32, atol=5e-2, rtol=5e-2), (
            float(jnp.max(jnp.abs(out - ref_f32))))

    print("KERNEL_OK")
</pallas_src>

<mosaic_0001>
module attributes {stable_mosaic.version = 11 : i64} {
  func.func @tabular_kernel(%arg0: i32, %arg1: memref<4x128xi32, #tpu.memory_space<vmem>>, %arg2: memref<40x32xbf16, #tpu.memory_space<vmem>>, %arg3: memref<80x40xbf16, #tpu.memory_space<vmem>>, %arg4: memref<40x1xf32, #tpu.memory_space<vmem>>, %arg5: memref<40x40xbf16, #tpu.memory_space<vmem>>, %arg6: memref<40x1xf32, #tpu.memory_space<vmem>>, %arg7: memref<1x40xf32, #tpu.memory_space<vmem>>, %arg8: memref<1x1xf32, #tpu.memory_space<vmem>>, %arg9: memref<1x128xf32, #tpu.memory_space<vmem>>) attributes {dimension_semantics = [#tpu.dimension_semantics<parallel>], iteration_bounds = array<i64: 1>, scalar_prefetch = 0 : i64, scratch_operands = 0 : i64, tpu.core_type = #tpu.core_type<tc>, window_params = [{transform_indices = @transform_0, window_bounds = array<i64: 4, 128>}, {pipeline_mode = #tpu.pipeline_mode<synchronous>, transform_indices = @transform_1, window_bounds = array<i64: 40, 32>}, {pipeline_mode = #tpu.pipeline_mode<synchronous>, transform_indices = @transform_2, window_bounds = array<i64: 80, 40>}, {pipeline_mode = #tpu.pipeline_mode<synchronous>, transform_indices = @transform_3, window_bounds = array<i64: 40, 1>}, {pipeline_mode = #tpu.pipeline_mode<synchronous>, transform_indices = @transform_4, window_bounds = array<i64: 40, 40>}, {pipeline_mode = #tpu.pipeline_mode<synchronous>, transform_indices = @transform_5, window_bounds = array<i64: 40, 1>}, {pipeline_mode = #tpu.pipeline_mode<synchronous>, transform_indices = @transform_6, window_bounds = array<i64: 1, 40>}, {pipeline_mode = #tpu.pipeline_mode<synchronous>, transform_indices = @transform_7, window_bounds = array<i64: 1, 1>}, {transform_indices = @transform_8, window_bounds = array<i64: 1, 128>}]} {
    %c0 = arith.constant 0 : index
    %c0_0 = arith.constant 0 : index
    %0 = vector.load %arg1[%c0, %c0_0] : memref<4x128xi32, #tpu.memory_space<vmem>>, vector<4x128xi32>
    %1 = tpu.iota {dimensions = array<i32: 0>} : vector<32x128xi32>
    %2 = vector.extract_strided_slice %0 {offsets = [0, 0], sizes = [1, 128], strides = [1, 1]} : vector<4x128xi32> to vector<1x128xi32>
    %c0_i32 = arith.constant 0 : i32
    %3 = vector.broadcast %c0_i32 : i32 to vector<1x128xi32>
    %4 = arith.addi %2, %3 : vector<1x128xi32>
    %5 = vector.broadcast %4 : vector<1x128xi32> to vector<32x128xi32>
    %6 = arith.cmpi eq, %1, %5 : vector<32x128xi32>
    %7 = vector.extract_strided_slice %0 {offsets = [1, 0], sizes = [1, 128], strides = [1, 1]} : vector<4x128xi32> to vector<1x128xi32>
    %c6_i32 = arith.constant 6 : i32
    %8 = vector.broadcast %c6_i32 : i32 to vector<1x128xi32>
    %9 = arith.addi %7, %8 : vector<1x128xi32>
    %10 = vector.broadcast %9 : vector<1x128xi32> to vector<32x128xi32>
    %11 = arith.cmpi eq, %1, %10 : vector<32x128xi32>
    %12 = arith.ori %6, %11 : vector<32x128xi1>
    %13 = vector.extract_strided_slice %0 {offsets = [2, 0], sizes = [1, 128], strides = [1, 1]} : vector<4x128xi32> to vector<1x128xi32>
    %c13_i32 = arith.constant 13 : i32
    %14 = vector.broadcast %c13_i32 : i32 to vector<1x128xi32>
    %15 = arith.addi %13, %14 : vector<1x128xi32>
    %16 = vector.broadcast %15 : vector<1x128xi32> to vector<32x128xi32>
    %17 = arith.cmpi eq, %1, %16 : vector<32x128xi32>
    %18 = arith.ori %12, %17 : vector<32x128xi1>
    %19 = vector.extract_strided_slice %0 {offsets = [3, 0], sizes = [1, 128], strides = [1, 1]} : vector<4x128xi32> to vector<1x128xi32>
    %c16_i32 = arith.constant 16 : i32
    %20 = vector.broadcast %c16_i32 : i32 to vector<1x128xi32>
    %21 = arith.addi %19, %20 : vector<1x128xi32>
    %22 = vector.broadcast %21 : vector<1x128xi32> to vector<32x128xi32>
    %23 = arith.cmpi eq, %1, %22 : vector<32x128xi32>
    %24 = arith.ori %18, %23 : vector<32x128xi1>
    %25 = vector.extract_strided_slice %0 {offsets = [3, 0], sizes = [1, 128], strides = [1, 1]} : vector<4x128xi32> to vector<1x128xi32>
    %26 = arith.sitofp %25 : vector<1x128xi32> to vector<1x128xf32>
    %27 = arith.extui %24 : vector<32x128xi1> to vector<32x128xi32>
    %28 = arith.sitofp %27 : vector<32x128xi32> to vector<32x128xf32>
    %c29_i32 = arith.constant 29 : i32
    %29 = vector.broadcast %c29_i32 : i32 to vector<32x128xi32>
    %30 = arith.cmpi eq, %1, %29 : vector<32x128xi32>
    %cst = arith.constant 0.000000e+00 : f32
    %31 = vector.shape_cast %26 : vector<1x128xf32> to vector<1x128xf32>
    %32 = vector.broadcast %31 : vector<1x128xf32> to vector<32x128xf32>
    %33 = vector.broadcast %cst : f32 to vector<32x128xf32>
    %34 = arith.select %30, %32, %33 : vector<32x128xi1>, vector<32x128xf32>
    %35 = arith.addf %28, %34 : vector<32x128xf32>
    %c30_i32 = arith.constant 30 : i32
    %36 = vector.broadcast %c30_i32 : i32 to vector<32x128xi32>
    %37 = arith.cmpi eq, %1, %36 : vector<32x128xi32>
    %38 = arith.extui %37 : vector<32x128xi1> to vector<32x128xi32>
    %39 = arith.sitofp %38 : vector<32x128xi32> to vector<32x128xf32>
    %40 = arith.addf %35, %39 : vector<32x128xf32>
    %c0_1 = arith.constant 0 : index
    %c0_2 = arith.constant 0 : index
    %41 = vector.load %arg2[%c0_1, %c0_2] : memref<40x32xbf16, #tpu.memory_space<vmem>>, vector<40x32xbf16>
    %42 = arith.truncf %40 : vector<32x128xf32> to vector<32x128xbf16>
    %cst_3 = arith.constant dense<0.000000e+00> : vector<40x128xf32>
    %43 = tpu.matmul %41, %42, %cst_3 {dimension_numbers = #tpu.dot_dimension_numbers<[1], [0], [0], [1], [0, 0, 1, 1], [], []>} : vector<40x32xbf16>, vector<32x128xbf16>, vector<40x128xf32> -> vector<40x128xf32>
    %c0_4 = arith.constant 0 : index
    %c0_5 = arith.constant 0 : index
    %44 = vector.load %arg4[%c0_4, %c0_5] : memref<40x1xf32, #tpu.memory_space<vmem>>, vector<40x1xf32>
    %45 = vector.shape_cast %44 : vector<40x1xf32> to vector<40x1xf32>
    %46 = vector.broadcast %45 : vector<40x1xf32> to vector<40x128xf32>
    %c0_6 = arith.constant 0 : index
    %c0_7 = arith.constant 0 : index
    %47 = vector.load %arg6[%c0_6, %c0_7] : memref<40x1xf32, #tpu.memory_space<vmem>>, vector<40x1xf32>
    %48 = vector.shape_cast %47 : vector<40x1xf32> to vector<40x1xf32>
    %49 = vector.broadcast %48 : vector<40x1xf32> to vector<40x128xf32>
    %c0_8 = arith.constant 0 : index
    %c0_9 = arith.constant 0 : index
    %50 = vector.load %arg3[%c0_8, %c0_9] : memref<80x40xbf16, #tpu.memory_space<vmem>>, vector<80x40xbf16>
    %c0_10 = arith.constant 0 : index
    %c0_11 = arith.constant 0 : index
    %51 = vector.load %arg5[%c0_10, %c0_11] : memref<40x40xbf16, #tpu.memory_space<vmem>>, vector<40x40xbf16>
    %52 = arith.truncf %43 : vector<40x128xf32> to vector<40x128xbf16>
    %cst_12 = arith.constant dense<0.000000e+00> : vector<80x128xf32>
    %53 = tpu.matmul %50, %52, %cst_12 {dimension_numbers = #tpu.dot_dimension_numbers<[1], [0], [0], [1], [0, 0, 1, 1], [], []>} : vector<80x40xbf16>, vector<40x128xbf16>, vector<80x128xf32> -> vector<80x128xf32>
    %54 = vector.extract_strided_slice %53 {offsets = [0, 0], sizes = [40, 128], strides = [1, 1]} : vector<80x128xf32> to vector<40x128xf32>
    %55 = arith.addf %54, %46 : vector<40x128xf32>
    %56 = arith.negf %55 : vector<40x128xf32>
    %57 = math.exp %56 : vector<40x128xf32>
    %cst_13 = arith.constant 1.000000e+00 : f32
    %58 = vector.broadcast %cst_13 : f32 to vector<40x128xf32>
    %59 = arith.addf %58, %57 : vector<40x128xf32>
    %60 = arith.divf %58, %59 : vector<40x128xf32>
    %61 = arith.mulf %43, %60 : vector<40x128xf32>
    %62 = vector.extract_strided_slice %53 {offsets = [40, 0], sizes = [40, 128], strides = [1, 1]} : vector<80x128xf32> to vector<40x128xf32>
    %63 = arith.addf %43, %62 : vector<40x128xf32>
    %64 = arith.addf %63, %49 : vector<40x128xf32>
    %65 = arith.truncf %61 : vector<40x128xf32> to vector<40x128xbf16>
    %cst_14 = arith.constant dense<0.000000e+00> : vector<40x128xf32>
    %66 = tpu.matmul %51, %65, %cst_14 {dimension_numbers = #tpu.dot_dimension_numbers<[1], [0], [0], [1], [0, 0, 1, 1], [], []>} : vector<40x40xbf16>, vector<40x128xbf16>, vector<40x128xf32> -> vector<40x128xf32>
    %67 = arith.addf %64, %66 : vector<40x128xf32>
    %68 = arith.truncf %67 : vector<40x128xf32> to vector<40x128xbf16>
    %cst_15 = arith.constant dense<0.000000e+00> : vector<80x128xf32>
    %69 = tpu.matmul %50, %68, %cst_15 {dimension_numbers = #tpu.dot_dimension_numbers<[1], [0], [0], [1], [0, 0, 1, 1], [], []>} : vector<80x40xbf16>, vector<40x128xbf16>, vector<80x128xf32> -> vector<80x128xf32>
    %70 = vector.extract_strided_slice %69 {offsets = [0, 0], sizes = [40, 128], strides = [1, 1]} : vector<80x128xf32> to vector<40x128xf32>
    %71 = arith.addf %70, %46 : vector<40x128xf32>
    %72 = arith.negf %71 : vector<40x128xf32>
    %73 = math.exp %72 : vector<40x128xf32>
    %cst_16 = arith.constant 1.000000e+00 : f32
    %74 = vector.broadcast %cst_16 : f32 to vector<40x128xf32>
    %75 = arith.addf %74, %73 : vector<40x128xf32>
    %76 = arith.divf %74, %75 : vector<40x128xf32>
    %77 = arith.mulf %67, %76 : vector<40x128xf32>
    %78 = vector.extract_strided_slice %69 {offsets = [40, 0], sizes = [40, 128], strides = [1, 1]} : vector<80x128xf32> to vector<40x128xf32>
    %79 = arith.addf %67, %78 : vector<40x128xf32>
    %80 = arith.addf %79, %49 : vector<40x128xf32>
    %81 = arith.truncf %77 : vector<40x128xf32> to vector<40x128xbf16>
    %cst_17 = arith.constant dense<0.000000e+00> : vector<40x128xf32>
    %82 = tpu.matmul %51, %81, %cst_17 {dimension_numbers = #tpu.dot_dimension_numbers<[1], [0], [0], [1], [0, 0, 1, 1], [], []>} : vector<40x40xbf16>, vector<40x128xbf16>, vector<40x128xf32> -> vector<40x128xf32>
    %83 = arith.addf %80, %82 : vector<40x128xf32>
    %84 = arith.truncf %83 : vector<40x128xf32> to vector<40x128xbf16>
    %cst_18 = arith.constant dense<0.000000e+00> : vector<80x128xf32>
    %85 = tpu.matmul %50, %84, %cst_18 {dimension_numbers = #tpu.dot_dimension_numbers<[1], [0], [0], [1], [0, 0, 1, 1], [], []>} : vector<80x40xbf16>, vector<40x128xbf16>, vector<80x128xf32> -> vector<80x128xf32>
    %86 = vector.extract_strided_slice %85 {offsets = [0, 0], sizes = [40, 128], strides = [1, 1]} : vector<80x128xf32> to vector<40x128xf32>
    %87 = arith.addf %86, %46 : vector<40x128xf32>
    %88 = arith.negf %87 : vector<40x128xf32>
    %89 = math.exp %88 : vector<40x128xf32>
    %cst_19 = arith.constant 1.000000e+00 : f32
    %90 = vector.broadcast %cst_19 : f32 to vector<40x128xf32>
    %91 = arith.addf %90, %89 : vector<40x128xf32>
    %92 = arith.divf %90, %91 : vector<40x128xf32>
    %93 = arith.mulf %83, %92 : vector<40x128xf32>
    %94 = vector.extract_strided_slice %85 {offsets = [40, 0], sizes = [40, 128], strides = [1, 1]} : vector<80x128xf32> to vector<40x128xf32>
    %95 = arith.addf %83, %94 : vector<40x128xf32>
    %96 = arith.addf %95, %49 : vector<40x128xf32>
    %97 = arith.truncf %93 : vector<40x128xf32> to vector<40x128xbf16>
    %cst_20 = arith.constant dense<0.000000e+00> : vector<40x128xf32>
    %98 = tpu.matmul %51, %97, %cst_20 {dimension_numbers = #tpu.dot_dimension_numbers<[1], [0], [0], [1], [0, 0, 1, 1], [], []>} : vector<40x40xbf16>, vector<40x128xbf16>, vector<40x128xf32> -> vector<40x128xf32>
    %99 = arith.addf %96, %98 : vector<40x128xf32>
    %100 = arith.truncf %99 : vector<40x128xf32> to vector<40x128xbf16>
    %cst_21 = arith.constant dense<0.000000e+00> : vector<80x128xf32>
    %101 = tpu.matmul %50, %100, %cst_21 {dimension_numbers = #tpu.dot_dimension_numbers<[1], [0], [0], [1], [0, 0, 1, 1], [], []>} : vector<80x40xbf16>, vector<40x128xbf16>, vector<80x128xf32> -> vector<80x128xf32>
    %102 = vector.extract_strided_slice %101 {offsets = [0, 0], sizes = [40, 128], strides = [1, 1]} : vector<80x128xf32> to vector<40x128xf32>
    %103 = arith.addf %102, %46 : vector<40x128xf32>
    %104 = arith.negf %103 : vector<40x128xf32>
    %105 = math.exp %104 : vector<40x128xf32>
    %cst_22 = arith.constant 1.000000e+00 : f32
    %106 = vector.broadcast %cst_22 : f32 to vector<40x128xf32>
    %107 = arith.addf %106, %105 : vector<40x128xf32>
    %108 = arith.divf %106, %107 : vector<40x128xf32>
    %109 = arith.mulf %99, %108 : vector<40x128xf32>
    %110 = vector.extract_strided_slice %101 {offsets = [40, 0], sizes = [40, 128], strides = [1, 1]} : vector<80x128xf32> to vector<40x128xf32>
    %111 = arith.addf %99, %110 : vector<40x128xf32>
    %112 = arith.addf %111, %49 : vector<40x128xf32>
    %113 = arith.truncf %109 : vector<40x128xf32> to vector<40x128xbf16>
    %cst_23 = arith.constant dense<0.000000e+00> : vector<40x128xf32>
    %114 = tpu.matmul %51, %113, %cst_23 {dimension_numbers = #tpu.dot_dimension_numbers<[1], [0], [0], [1], [0, 0, 1, 1], [], []>} : vector<40x40xbf16>, vector<40x128xbf16>, vector<40x128xf32> -> vector<40x128xf32>
    %115 = arith.addf %112, %114 : vector<40x128xf32>
    %116 = arith.truncf %115 : vector<40x128xf32> to vector<40x128xbf16>
    %cst_24 = arith.constant dense<0.000000e+00> : vector<80x128xf32>
    %117 = tpu.matmul %50, %116, %cst_24 {dimension_numbers = #tpu.dot_dimension_numbers<[1], [0], [0], [1], [0, 0, 1, 1], [], []>} : vector<80x40xbf16>, vector<40x128xbf16>, vector<80x128xf32> -> vector<80x128xf32>
    %118 = vector.extract_strided_slice %117 {offsets = [0, 0], sizes = [40, 128], strides = [1, 1]} : vector<80x128xf32> to vector<40x128xf32>
    %119 = arith.addf %118, %46 : vector<40x128xf32>
    %120 = arith.negf %119 : vector<40x128xf32>
    %121 = math.exp %120 : vector<40x128xf32>
    %cst_25 = arith.constant 1.000000e+00 : f32
    %122 = vector.broadcast %cst_25 : f32 to vector<40x128xf32>
    %123 = arith.addf %122, %121 : vector<40x128xf32>
    %124 = arith.divf %122, %123 : vector<40x128xf32>
    %125 = arith.mulf %115, %124 : vector<40x128xf32>
    %126 = vector.extract_strided_slice %117 {offsets = [40, 0], sizes = [40, 128], strides = [1, 1]} : vector<80x128xf32> to vector<40x128xf32>
    %127 = arith.addf %115, %126 : vector<40x128xf32>
    %128 = arith.addf %127, %49 : vector<40x128xf32>
    %129 = arith.truncf %125 : vector<40x128xf32> to vector<40x128xbf16>
    %cst_26 = arith.constant dense<0.000000e+00> : vector<40x128xf32>
    %130 = tpu.matmul %51, %129, %cst_26 {dimension_numbers = #tpu.dot_dimension_numbers<[1], [0], [0], [1], [0, 0, 1, 1], [], []>} : vector<40x40xbf16>, vector<40x128xbf16>, vector<40x128xf32> -> vector<40x128xf32>
    %131 = arith.addf %128, %130 : vector<40x128xf32>
    %c0_27 = arith.constant 0 : index
    %c0_28 = arith.constant 0 : index
    %132 = vector.load %arg7[%c0_27, %c0_28] : memref<1x40xf32, #tpu.memory_space<vmem>>, vector<1x40xf32>
    %cst_29 = arith.constant dense<0.000000e+00> : vector<1x128xf32>
    %133 = tpu.matmul %132, %131, %cst_29 {dimension_numbers = #tpu.dot_dimension_numbers<[1], [0], [0], [1], [0, 0, 1, 1], [], []>} : vector<1x40xf32>, vector<40x128xf32>, vector<1x128xf32> -> vector<1x128xf32>
    %c0_30 = arith.constant 0 : index
    %c0_31 = arith.constant 0 : index
    %134 = vector.load %arg8[%c0_30, %c0_31] : memref<1x1xf32, #tpu.memory_space<vmem>>, vector<1x1xf32>
    %135 = vector.broadcast %134 : vector<1x1xf32> to vector<1x128xf32>
    %136 = arith.addf %133, %135 : vector<1x128xf32>
    %c0_32 = arith.constant 0 : index
    %c0_33 = arith.constant 0 : index
    %137 = vector.load %arg9[%c0_32, %c0_33] : memref<1x128xf32, #tpu.memory_space<vmem>>, vector<1x128xf32>
    tpu.vector_store %arg9[%c0_32, %c0_33], %136 {strides = array<i32>} : memref<1x128xf32, #tpu.memory_space<vmem>>, vector<1x128xf32>,
    return
  }
  func.func @transform_0(%arg0: i32) -> (i32, i32) {
    %c0_i32 = arith.constant 0 : i32
    %c0_i32_0 = arith.constant 0 : i32
    return %c0_i32, %arg0 : i32, i32
  }
  func.func @transform_1(%arg0: i32) -> (i32, i32) {
    %c0_i32 = arith.constant 0 : i32
    %c0_i32_0 = arith.constant 0 : i32
    %c0_i32_1 = arith.constant 0 : i32
    return %c0_i32, %c0_i32_0 : i32, i32
  }
  func.func @transform_2(%arg0: i32) -> (i32, i32) {
    %c0_i32 = arith.constant 0 : i32
    %c0_i32_0 = arith.constant 0 : i32
    %c0_i32_1 = arith.constant 0 : i32
    return %c0_i32, %c0_i32_0 : i32, i32
  }
  func.func @transform_3(%arg0: i32) -> (i32, i32) {
    %c0_i32 = arith.constant 0 : i32
    %c0_i32_0 = arith.constant 0 : i32
    %c0_i32_1 = arith.constant 0 : i32
    return %c0_i32, %c0_i32_0 : i32, i32
  }
  func.func @transform_4(%arg0: i32) -> (i32, i32) {
    %c0_i32 = arith.constant 0 : i32
    %c0_i32_0 = arith.constant 0 : i32
    %c0_i32_1 = arith.constant 0 : i32
    return %c0_i32, %c0_i32_0 : i32, i32
  }
  func.func @transform_5(%arg0: i32) -> (i32, i32) {
    %c0_i32 = arith.constant 0 : i32
    %c0_i32_0 = arith.constant 0 : i32
    %c0_i32_1 = arith.constant 0 : i32
    return %c0_i32, %c0_i32_0 : i32, i32
  }
  func.func @transform_6(%arg0: i32) -> (i32, i32) {
    %c0_i32 = arith.constant 0 : i32
    %c0_i32_0 = arith.constant 0 : i32
    %c0_i32_1 = arith.constant 0 : i32
    return %c0_i32, %c0_i32_0 : i32, i32
  }
  func.func @transform_7(%arg0: i32) -> (i32, i32) {
    %c0_i32 = arith.constant 0 : i32
    %c0_i32_0 = arith.constant 0 : i32
    %c0_i32_1 = arith.constant 0 : i32
    return %c0_i32, %c0_i32_0 : i32, i32
  }
  func.func @transform_8(%arg0: i32) -> (i32, i32) {
    %c0_i32 = arith.constant 0 : i32
    %c0_i32_0 = arith.constant 0 : i32
    return %c0_i32, %arg0 : i32, i32
  }
}

</mosaic_0001>

<llo_original>
// kernel: tpu_custom_call.1
$region0: #{tpu_custom_call.1}
  #allocation0 [shape = 'u32[]', space=smem, size = 0x4, offset = 0x4, fixed_abs, tag = 'smem constant byte address 0x4 - core index']
  #allocation1 [shape = 'u32[144,128]{1,0:T(1,128)}', space=vmem, size = 0x12000, scoped, tag = 'internal scratch']
  #allocation2 [shape = 'f32[1,1]{1,0:T(1,128)S(1)}', space=vmem, size = 0x200, scoped, tag = 'scoped memory for tpu_custom_call.1']
  %s0 = inlined_call_operand.vmem [shape: s32[4,128], index: 0, kind: input, shape index: {}]
  %s1 = inlined_call_operand.vmem [shape: bf16[40,32], index: 1, kind: input, shape index: {}]
  %s2 = inlined_call_operand.vmem [shape: bf16[80,40], index: 2, kind: input, shape index: {}]
  %s3 = inlined_call_operand.vmem [shape: f32[40,1], index: 3, kind: input, shape index: {}]
  %s4 = inlined_call_operand.vmem [shape: bf16[40,40], index: 4, kind: input, shape index: {}]
  %s5 = inlined_call_operand.vmem [shape: f32[40,1], index: 5, kind: input, shape index: {}]
  %s6 = inlined_call_operand.vmem [shape: f32[1,40], index: 6, kind: input, shape index: {}]
  %s7 = inlined_call_operand.<no memory space> [shape: f32[1,1], index: 7, kind: input, shape index: {}]
  %s8 = inlined_call_operand.hbm [shape: f32[1,128], index: 8, kind: output, shape index: {}]
  %s9 = sld [smem:[#allocation0]]
  $region42: #{tpu_custom_call.1} parent=0
    _
  %s11 = ssub.s32 1, %s9
  %s12 = scalar_select 0, %s11, %s9
  %v13 = vstv %s7
  %14 = vst [vmem:[#allocation2] sm:$0x1] %v13
  $region1: #{tpu_custom_call.1} parent=0
    #allocation3 [shape = 'u8[512]{0}', space=vmem, size = 0x400, scoped, tag = 'output window, operand 0, single buffered']
    #allocation4 [shape = 's32[1]{0}', space=sflag, size = 0x4, scoped, tag = 'scoped memory for tpu_custom_call.1']
    %15 = vsyncpa [#allocation4], 0
    // Predicated region
    $region2: #{tpu_custom_call.1} parent=1 // pred_check
      _
    $region3: #{tpu_custom_call.1} parent=1 // pred_check_branch
      %17 = sbr.rel (0) target = $region5
    $region4: #{tpu_custom_call.1} parent=1 // pred_region
      _
    $region5: #{tpu_custom_call.1} parent=1 // pred_fallthru
      _
    // Predicated region
    $region6: #{tpu_custom_call.1} parent=1 // pred_check
      _
    $region7: #{tpu_custom_call.1} parent=1 // pred_check_branch
      %19 = sbr.rel (0) target = $region9
    $region8: #{tpu_custom_call.1} parent=1 // pred_region
      _
    $region9: #{tpu_custom_call.1} parent=1 // pred_fallthru
      _
    // Predicated region
    $region10: #{tpu_custom_call.1} parent=1 // pred_check
      _
    $region11: #{tpu_custom_call.1} parent=1 // pred_check_branch
      %21 = sbr.rel (0) target = $region13
    $region12: #{tpu_custom_call.1} parent=1 // pred_region
      _
    $region13: #{tpu_custom_call.1} parent=1 // pred_fallthru
      _
    // Predicated region
    $region14: #{tpu_custom_call.1} parent=1 // pred_check
      _
    $region15: #{tpu_custom_call.1} parent=1 // pred_check_branch
      %23 = sbr.rel (0) target = $region17
    $region16: #{tpu_custom_call.1} parent=1 // pred_region
      _
    $region17: #{tpu_custom_call.1} parent=1 // pred_fallthru
      _
    // Predicated region
    $region18: #{tpu_custom_call.1} parent=1 // pred_check
      _
    $region19: #{tpu_custom_call.1} parent=1 // pred_check_branch
      %25 = sbr.rel (0) target = $region21
    $region20: #{tpu_custom_call.1} parent=1 // pred_region
      _
    $region21: #{tpu_custom_call.1} parent=1 // pred_fallthru
      _
    // Predicated region
    $region22: #{tpu_custom_call.1} parent=1 // pred_check
      _
    $region23: #{tpu_custom_call.1} parent=1 // pred_check_branch
      %27 = sbr.rel (0) target = $region25
    $region24: #{tpu_custom_call.1} parent=1 // pred_region
      _
    $region25: #{tpu_custom_call.1} parent=1 // pred_fallthru
      _
    // Predicated region
    $region26: #{tpu_custom_call.1} parent=1 // pred_check
      _
    $region27: #{tpu_custom_call.1} parent=1 // pred_check_branch
      %29 = sbr.rel (0) target = $region29
    $region28: #{tpu_custom_call.1} parent=1 // pred_region
      _
    $region29: #{tpu_custom_call.1} parent=1 // pred_fallthru
      _
    // Predicated region
    $region30: #{tpu_custom_call.1} parent=1 // pred_check
      _
    $region31: #{tpu_custom_call.1} parent=1 // pred_check_branch
      %31 = sbr.rel (0) target = $region33
    $region32: #{tpu_custom_call.1} parent=1 // pred_region
      _
    $region33: #{tpu_custom_call.1} parent=1 // pred_fallthru
      _
    %v33 = vld [vmem:[%s0] sm:$0xf]
    %v34 = vlaneseq
    %v35 = vshrl.u32 %v34, 7
    %v36 = vadd.s32 %v35, 8
    %v37 = vadd.s32 %v35, 16
    %v38 = vadd.s32 %v35, 24
    %v39 = vlaneseq
    %v40 = vshrl.u32 %v39, 7
    %v41 = vsub.s32 0, %v40
    %v42 = vrot.slane %v33, %v41
    %vm43 = vcmp.eq.s32.totalorder %v35, %v42
    %vm44 = vcmp.eq.s32.totalorder %v36, %v42
    %vm45 = vcmp.eq.s32.totalorder %v37, %v42
    %vm46 = vcmp.eq.s32.totalorder %v38, %v42
    %v47 = vadd.s32 %v33, 6
    %v48 = vlaneseq
    %v49 = vshrl.u32 %v48, 7
    %v50 = vsub.s32 1, %v49
    %v51 = vrot.slane %v47, %v50
    %vm52 = vcmp.eq.s32.totalorder %v35, %v51
    %vm53 = vcmp.eq.s32.totalorder %v36, %v51
    %vm54 = vcmp.eq.s32.totalorder %v37, %v51
    %vm55 = vcmp.eq.s32.totalorder %v38, %v51
    %vm56 = vmor %vm43, %vm52
    %vm57 = vmor %vm44, %vm53
    %vm58 = vmor %vm45, %vm54
    %vm59 = vmor %vm46, %vm55
    %v60 = vadd.s32 %v33, 13
    %v61 = vlaneseq
    %v62 = vshrl.u32 %v61, 7
    %v63 = vsub.s32 2, %v62
    %v64 = vrot.slane %v60, %v63
    %vm65 = vcmp.eq.s32.totalorder %v35, %v64
    %vm66 = vcmp.eq.s32.totalorder %v36, %v64
    %vm67 = vcmp.eq.s32.totalorder %v37, %v64
    %vm68 = vcmp.eq.s32.totalorder %v38, %v64
    %vm69 = vmor %vm56, %vm65
    %vm70 = vmor %vm57, %vm66
    %vm71 = vmor %vm58, %vm67
    %vm72 = vmor %vm59, %vm68
    %v73 = vadd.s32 %v33, 16
    %v74 = vlaneseq
    %v75 = vshrl.u32 %v74, 7
    %v76 = vsub.s32 3, %v75
    %v77 = vrot.slane %v73, %v76
    %vm78 = vcmp.eq.s32.totalorder %v35, %v77
    %vm79 = vcmp.eq.s32.totalorder %v36, %v77
    %vm80 = vcmp.eq.s32.totalorder %v37, %v77
    %vm81 = vcmp.eq.s32.totalorder %v38, %v77
    %vm82 = vmor %vm69, %vm78
    %vm83 = vmor %vm70, %vm79
    %vm84 = vmor %vm71, %vm80
    %vm85 = vmor %vm72, %vm81
    %v86 = vcvt.s32.f32 %v33
    %v87 = vsel %vm82, 1, 0
    %v88 = vsel %vm83, 1, 0
    %v89 = vsel %vm84, 1, 0
    %v90 = vsel %vm85, 1, 0
    %v91 = vcvt.s32.f32 %v87
    %v92 = vcvt.s32.f32 %v88
    %v93 = vcvt.s32.f32 %v89
    %v94 = vcvt.s32.f32 %v90
    %vm95 = vcmp.eq.s32.totalorder %v35, 29
    %vm96 = vcmp.eq.s32.totalorder %v36, 29
    %vm97 = vcmp.eq.s32.totalorder %v37, 29
    %vm98 = vcmp.eq.s32.totalorder %v38, 29
    %v99 = vlaneseq
    %v100 = vshrl.u32 %v99, 7
    %v101 = vsub.s32 3, %v100
    %v102 = vrot.slane %v86, %v101
    %v103 = vsel %vm95, %v102, 0.0
    %v104 = vsel %vm96, %v102, 0.0
    %v105 = vsel %vm97, %v102, 0.0
    %v106 = vsel %vm98, %v102, 0.0
    %v107 = vadd.f32 %v91, %v103
    %v108 = vadd.f32 %v92, %v104
    %v109 = vadd.f32 %v93, %v105
    %v110 = vadd.f32 %v94, %v106
    %vm111 = vcmp.eq.s32.totalorder %v35, 30
    %vm112 = vcmp.eq.s32.totalorder %v36, 30
    %vm113 = vcmp.eq.s32.totalorder %v37, 30
    %vm114 = vcmp.eq.s32.totalorder %v38, 30
    %v115 = vsel %vm111, 1, 0
    %v116 = vsel %vm112, 1, 0
    %v117 = vsel %vm113, 1, 0
    %v118 = vsel %vm114, 1, 0
    %v119 = vcvt.s32.f32 %v115
    %v120 = vcvt.s32.f32 %v116
    %v121 = vcvt.s32.f32 %v117
    %v122 = vcvt.s32.f32 %v118
    %v123 = vadd.f32 %v107, %v119
    %v124 = vadd.f32 %v108, %v120
    %v125 = vadd.f32 %v109, %v121
    %v126 = vadd.f32 %v110, %v122
    %v127 = vld [vmem:[%s1] sm:$0xf]
    %v128 = vld [vmem:[%s1 + $0x4] sm:$0xf]
    %v129 = vld [vmem:[%s1 + $0x8] sm:$0xf]
    %v130 = vld [vmem:[%s1 + $0xc] sm:$0xf]
    %v131 = vld [vmem:[%s1 + $0x10] sm:$0xf]
    %v132 = vpack.c.bf16 %v124, %v123
    %v133 = vpack.c.bf16 %v126, %v125
    %v139 = vunpack.c.l.b16 %v127
    %v140 = vunpack.c.l.b16 %v128
    %v141 = vunpack.c.l.b16 %v129
    %v142 = vunpack.c.l.b16 %v130
    %v143 = vunpack.c.l.b16 %v131
    %v144 = vpack.c.b16 %v140, %v139
    %v145 = vpack.c.b16 %v142, %v141
    %v146 = vpack.c.b16 %v143, %v143
    %vm147 = vcmask 261120
    %v149 = vsel %vm147, %v144, 0
    %v152 = vsel %vm147, %v145, 0
    %v155 = vsel %vm147, %v146, 0
    %157 = vmatprep.subr.bf16.mxu0 0
    %158 = vmatpush1.bf16.msra.mxu0 %v132
    %159 = vmatprep.subr.bf16.mxu0 0
    %160 = vmatpush1.bf16.msra.mxu0 %v133
    %161 = vmatprep.subr.bf16.mxu0 0
    %162 = vmatpush1.bf16.msra.mxu0 0
    %163 = vmatprep.subr.bf16.mxu0 0
    %164 = vmatpush1.bf16.msra.mxu0 0
    %165 = vmatprep.subr.bf16.mxu0 0
    %166 = vmatpush1.bf16.msra.mxu0 0
    %167 = vmatprep.subr.bf16.mxu0 0
    %168 = vmatpush1.bf16.msra.mxu0 0
    %169 = vmatprep.subr.bf16.mxu0 0
    %170 = vmatpush1.bf16.msra.mxu0 0
    %171 = vmatprep.subr.bf16.mxu0 0
    %172 = vmatpush1.bf16.msra.mxu0 0
    %173 = vmatprep.subr.bf16.mxu0 0
    %174 = vmatpush1.bf16.msra.mxu0 0
    %175 = vmatprep.subr.bf16.mxu0 0
    %176 = vmatpush1.bf16.msra.mxu0 0
    %177 = vmatprep.subr.bf16.mxu0 0
    %178 = vmatpush1.bf16.msra.mxu0 0
    %179 = vmatprep.subr.bf16.mxu0 0
    %180 = vmatpush1.bf16.msra.mxu0 0
    %181 = vmatprep.subr.bf16.mxu0 0
    %182 = vmatpush1.bf16.msra.mxu0 0
    %183 = vmatprep.subr.bf16.mxu0 0
    %184 = vmatpush1.bf16.msra.mxu0 0
    %185 = vmatprep.subr.bf16.mxu0 0
    %186 = vmatpush1.bf16.msra.mxu0 0
    %187 = vmatprep.subr.bf16.mxu0 0
    %188 = vmatpush1.bf16.msra.mxu0 0
    %189 = vmatprep.mubr.bf16.mxu0 0
    %190 = vmatmul.mubr.bf16.gmra.mrb[0].mxu0 %v149
    %v191 = vpop.f32.mrb[0].mxu0
    %v192 = vadd.f32 0.0, %v191
    %v193 = vpop.f32.mrb[0].mxu0
    %v194 = vpop.f32.mrb[0].mxu0
    %v195 = vadd.f32 0.0, %v194
    %v196 = vpop.f32.mrb[0].mxu0
    %197 = vmatprep.mubr.bf16.mxu0 0
    %198 = vmatmul.mubr.bf16.gmra.mrb[0].mxu0 %v152
    %v199 = vpop.f32.mrb[0].mxu0
    %v200 = vadd.f32 0.0, %v199
    %v201 = vpop.f32.mrb[0].mxu0
    %v202 = vpop.f32.mrb[0].mxu0
    %v203 = vadd.f32 0.0, %v202
    %v204 = vpop.f32.mrb[0].mxu0
    %205 = vmatprep.mubr.bf16.mxu0 0
    %206 = vmatmul.mubr.bf16.gmra.mrb[0].mxu0 %v155
    %v207 = vpop.f32.mrb[0].mxu0
    %v208 = vadd.f32 0.0, %v207
    %v209 = vpop.f32.mrb[0].mxu0
    %v210 = vpop.f32.mrb[0].mxu0
    %v211 = vpop.f32.mrb[0].mxu0
    %212 = vdwg.mxu0
    %v213 = vld [vmem:[%s3] sm:$0xff]
    %v214 = vld [vmem:[%s3 + $0x8] sm:$0xff]
    %v215 = vld [vmem:[%s3 + $0x10] sm:$0xff]
    %v216 = vld [vmem:[%s3 + $0x18] sm:$0xff]
    %v217 = vld [vmem:[%s3 + $0x20] sm:$0xff]
    %219 = vset.pattern.permute.xlu0 0
    %220 = vperm.xlu0 %219, %v213
    %v221 = vpop.permute.xlu0 %220
    %224 = vset.pattern.permute.xlu0 0
    %225 = vperm.xlu0 %224, %v214
    %v226 = vpop.permute.xlu0 %225
    %229 = vset.pattern.permute.xlu0 0
    %230 = vperm.xlu0 %229, %v215
    %v231 = vpop.permute.xlu0 %230
    %234 = vset.pattern.permute.xlu0 0
    %235 = vperm.xlu0 %234, %v216
    %v236 = vpop.permute.xlu0 %235
    %239 = vset.pattern.permute.xlu0 0
    %240 = vperm.xlu0 %239, %v217
    %v241 = vpop.permute.xlu0 %240
    %v243 = vld [vmem:[%s5] sm:$0xff]
    %v244 = vld [vmem:[%s5 + $0x8] sm:$0xff]
    %v245 = vld [vmem:[%s5 + $0x10] sm:$0xff]
    %v246 = vld [vmem:[%s5 + $0x18] sm:$0xff]
    %v247 = vld [vmem:[%s5 + $0x20] sm:$0xff]
    %249 = vset.pattern.permute.xlu0 0
    %250 = vperm.xlu0 %249, %v243
    %v251 = vpop.permute.xlu0 %250
    %254 = vset.pattern.permute.xlu0 0
    %255 = vperm.xlu0 %254, %v244
    %v256 = vpop.permute.xlu0 %255
    %259 = vset.pattern.permute.xlu0 0
    %260 = vperm.xlu0 %259, %v245
    %v261 = vpop.permute.xlu0 %260
    %264 = vset.pattern.permute.xlu0 0
    %265 = vperm.xlu0 %264, %v246
    %v266 = vpop.permute.xlu0 %265
    %269 = vset.pattern.permute.xlu0 0
    %270 = vperm.xlu0 %269, %v247
    %v271 = vpop.permute.xlu0 %270
    %v273 = vld [vmem:[%s2] sm:$0xf]
    %v274 = vld [vmem:[%s2 + $0x4] sm:$0xf]
    %v275 = vld [vmem:[%s2 + $0x8] sm:$0xf]
    %v276 = vld [vmem:[%s2 + $0xc] sm:$0xf]
    %v277 = vld [vmem:[%s2 + $0x10] sm:$0xf]
    %v278 = vld [vmem:[%s2 + $0x14] sm:$0xf]
    %v279 = vld [vmem:[%s2 + $0x18] sm:$0xf]
    %v280 = vld [vmem:[%s2 + $0x1c] sm:$0xf]
    %v281 = vld [vmem:[%s2 + $0x20] sm:$0xf]
    %v282 = vld [vmem:[%s2 + $0x24] sm:$0xf]
    %v283 = vld [vmem:[%s4] sm:$0xf]
    %v284 = vld [vmem:[%s4 + $0x4] sm:$0xf]
    %v285 = vld [vmem:[%s4 + $0x8] sm:$0xf]
    %v286 = vld [vmem:[%s4 + $0xc] sm:$0xf]
    %v287 = vld [vmem:[%s4 + $0x10] sm:$0xf]
    %v288 = vpack.c.bf16 %v195, %v192
    %v289 = vpack.c.bf16 %v203, %v200
    %v290 = vpack.c.bf16 %v208, %v208
    %v301 = vunpack.c.l.b16 %v273
    %v302 = vunpack.c.l.b16 %v274
    %v303 = vunpack.c.l.b16 %v275
    %v304 = vunpack.c.l.b16 %v276
    %v305 = vunpack.c.l.b16 %v277
    %v306 = vunpack.c.l.b16 %v278
    %v307 = vunpack.c.l.b16 %v279
    %v308 = vunpack.c.l.b16 %v280
    %v309 = vunpack.c.l.b16 %v281
    %v310 = vunpack.c.l.b16 %v282
    %v311 = vpack.c.b16 %v302, %v301
    %v312 = vpack.c.b16 %v304, %v303
    %v313 = vpack.c.b16 %v306, %v305
    %v314 = vpack.c.b16 %v308, %v307
    %v315 = vpack.c.b16 %v310, %v309
    %vm316 = vcmask 326656
    %v318 = vsel %vm316, %v311, 0
    %v321 = vsel %vm316, %v312, 0
    %v324 = vsel %vm316, %v313, 0
    %v327 = vsel %vm316, %v314, 0
    %v330 = vsel %vm316, %v315, 0
    %vm332 = vcmask 1043456
    %v334 = vsel %vm332, %v290, 0
    %336 = vmatprep.subr.bf16.mxu0 0
    %337 = vmatpush1.bf16.msra.mxu0 %v288
    %338 = vmatprep.subr.bf16.mxu0 0
    %339 = vmatpush1.bf16.msra.mxu0 %v289
    %340 = vmatprep.subr.bf16.mxu0 0
    %341 = vmatpush1.bf16.msra.mxu0 %v334
    %342 = vmatprep.subr.bf16.mxu0 0
    %343 = vmatpush1.bf16.msra.mxu0 0
    %344 = vmatprep.subr.bf16.mxu0 0
    %345 = vmatpush1.bf16.msra.mxu0 0
    %346 = vmatprep.subr.bf16.mxu0 0
    %347 = vmatpush1.bf16.msra.mxu0 0
    %348 = vmatprep.subr.bf16.mxu0 0
    %349 = vmatpush1.bf16.msra.mxu0 0
    %350 = vmatprep.subr.bf16.mxu0 0
    %351 = vmatpush1.bf16.msra.mxu0 0
    %352 = vmatprep.subr.bf16.mxu0 0
    %353 = vmatpush1.bf16.msra.mxu0 0
    %354 = vmatprep.subr.bf16.mxu0 0
    %355 = vmatpush1.bf16.msra.mxu0 0
    %356 = vmatprep.subr.bf16.mxu0 0
    %357 = vmatpush1.bf16.msra.mxu0 0
    %358 = vmatprep.subr.bf16.mxu0 0
    %359 = vmatpush1.bf16.msra.mxu0 0
    %360 = vmatprep.subr.bf16.mxu0 0
    %361 = vmatpush1.bf16.msra.mxu0 0
    %362 = vmatprep.subr.bf16.mxu0 0
    %363 = vmatpush1.bf16.msra.mxu0 0
    %364 = vmatprep.subr.bf16.mxu0 0
    %365 = vmatpush1.bf16.msra.mxu0 0
    %366 = vmatprep.subr.bf16.mxu0 0
    %367 = vmatpush1.bf16.msra.mxu0 0
    %368 = vmatprep.mubr.bf16.mxu0 0
    %369 = vmatmul.mubr.bf16.gmra.mrb[0].mxu0 %v318
    %v370 = vpop.f32.mrb[0].mxu0
    %v371 = vadd.f32 0.0, %v370
    %v372 = vpop.f32.mrb[0].mxu0
    %v373 = vpop.f32.mrb[0].mxu0
    %v374 = vadd.f32 0.0, %v373
    %v375 = vpop.f32.mrb[0].mxu0
    %376 = vmatprep.mubr.bf16.mxu0 0
    %377 = vmatmul.mubr.bf16.gmra.mrb[0].mxu0 %v321
    %v378 = vpop.f32.mrb[0].mxu0
    %v379 = vadd.f32 0.0, %v378
    %v380 = vpop.f32.mrb[0].mxu0
    %v381 = vpop.f32.mrb[0].mxu0
    %v382 = vadd.f32 0.0, %v381
    %v383 = vpop.f32.mrb[0].mxu0
    %384 = vmatprep.mubr.bf16.mxu0 0
    %385 = vmatmul.mubr.bf16.gmra.mrb[0].mxu0 %v324
    %v386 = vpop.f32.mrb[0].mxu0
    %v387 = vadd.f32 0.0, %v386
    %v388 = vpop.f32.mrb[0].mxu0
    %v389 = vpop.f32.mrb[0].mxu0
    %v390 = vadd.f32 0.0, %v389
    %v391 = vpop.f32.mrb[0].mxu0
    %392 = vmatprep.mubr.bf16.mxu0 0
    %393 = vmatmul.mubr.bf16.gmra.mrb[0].mxu0 %v327
    %v394 = vpop.f32.mrb[0].mxu0
    %v395 = vadd.f32 0.0, %v394
    %v396 = vpop.f32.mrb[0].mxu0
    %v397 = vpop.f32.mrb[0].mxu0
    %v398 = vadd.f32 0.0, %v397
    %v399 = vpop.f32.mrb[0].mxu0
    %400 = vmatprep.mubr.bf16.mxu0 0
    %401 = vmatmul.mubr.bf16.gmra.mrb[0].mxu0 %v330
    %v402 = vpop.f32.mrb[0].mxu0
    %v403 = vadd.f32 0.0, %v402
    %v404 = vpop.f32.mrb[0].mxu0
    %v405 = vpop.f32.mrb[0].mxu0
    %v406 = vadd.f32 0.0, %v405
    %v407 = vpop.f32.mrb[0].mxu0
    %408 = vdwg.mxu0
    %v409 = vadd.f32 %v371, %v221
    %v410 = vadd.f32 %v374, %v226
    %v411 = vadd.f32 %v379, %v231
    %v412 = vadd.f32 %v382, %v236
    %v413 = vadd.f32 %v387, %v241
    %v414 = vxor.u32 %v409, 2147483648
    %v415 = vxor.u32 %v410, 2147483648
    %v416 = vxor.u32 %v411, 2147483648
    %v417 = vxor.u32 %v412, 2147483648
    %v418 = vxor.u32 %v413, 2147483648
    %v419 = vmul.f32 %v414, 1.442695
    %v420 = vpow.pop %v419
    %v421 = vmul.f32 %v415, 1.442695
    %v422 = vpow.pop %v421
    %v423 = vmul.f32 %v416, 1.442695
    %v424 = vpow.pop %v423
    %v425 = vmul.f32 %v417, 1.442695
    %v426 = vpow.pop %v425
    %v427 = vmul.f32 %v418, 1.442695
    %v428 = vpow.pop %v427
    %v429 = vadd.f32 %v420, 1.0
    %v430 = vadd.f32 %v422, 1.0
    %v431 = vadd.f32 %v424, 1.0
    %v432 = vadd.f32 %v426, 1.0
    %v433 = vadd.f32 %v428, 1.0
    %v434 = vrcp.pop %v429
    %v435 = vmul.f32 1.0, %v434
    %v436 = vrcp.pop %v430
    %v437 = vmul.f32 1.0, %v436
    %v438 = vrcp.pop %v431
    %v439 = vmul.f32 1.0, %v438
    %v440 = vrcp.pop %v432
    %v441 = vmul.f32 1.0, %v440
    %v442 = vrcp.pop %v433
    %v443 = vmul.f32 1.0, %v442
    %v444 = vmul.f32 %v192, %v435
    %v445 = vmul.f32 %v195, %v437
    %v446 = vmul.f32 %v200, %v439
    %v447 = vmul.f32 %v203, %v441
    %v448 = vmul.f32 %v208, %v443
    %v449 = vadd.f32 %v192, %v390
    %v450 = vadd.f32 %v195, %v395
    %v451 = vadd.f32 %v200, %v398
    %v452 = vadd.f32 %v203, %v403
    %v453 = vadd.f32 %v208, %v406
    %v454 = vadd.f32 %v449, %v251
    %v455 = vadd.f32 %v450, %v256
    %v456 = vadd.f32 %v451, %v261
    %v457 = vadd.f32 %v452, %v266
    %v458 = vadd.f32 %v453, %v271
    %v459 = vpack.c.bf16 %v445, %v444
    %v460 = vpack.c.bf16 %v447, %v446
    %v461 = vpack.c.bf16 %v448, %v448
    %v467 = vunpack.c.l.b16 %v283
    %v468 = vunpack.c.l.b16 %v284
    %v469 = vunpack.c.l.b16 %v285
    %v470 = vunpack.c.l.b16 %v286
    %v471 = vunpack.c.l.b16 %v287
    %v472 = vpack.c.b16 %v468, %v467
    %v473 = vpack.c.b16 %v470, %v469
    %v474 = vpack.c.b16 %v471, %v471
    %v476 = vsel %vm316, %v472, 0
    %v479 = vsel %vm316, %v473, 0
    %v482 = vsel %vm316, %v474, 0
    %v485 = vsel %vm332, %v461, 0
    %487 = vmatprep.subr.bf16.mxu0 0
    %488 = vmatpush1.bf16.msra.mxu0 %v459
    %489 = vmatprep.subr.bf16.mxu0 0
    %490 = vmatpush1.bf16.msra.mxu0 %v460
    %491 = vmatprep.subr.bf16.mxu0 0
    %492 = vmatpush1.bf16.msra.mxu0 %v485
    %493 = vmatprep.subr.bf16.mxu0 0
    %494 = vmatpush1.bf16.msra.mxu0 0
    %495 = vmatprep.subr.bf16.mxu0 0
    %496 = vmatpush1.bf16.msra.mxu0 0
    %497 = vmatprep.subr.bf16.mxu0 0
    %498 = vmatpush1.bf16.msra.mxu0 0
    %499 = vmatprep.subr.bf16.mxu0 0
    %500 = vmatpush1.bf16.msra.mxu0 0
    %501 = vmatprep.subr.bf16.mxu0 0
    %502 = vmatpush1.bf16.msra.mxu0 0
    %503 = vmatprep.subr.bf16.mxu0 0
    %504 = vmatpush1.bf16.msra.mxu0 0
    %505 = vmatprep.subr.bf16.mxu0 0
    %506 = vmatpush1.bf16.msra.mxu0 0
    %507 = vmatprep.subr.bf16.mxu0 0
    %508 = vmatpush1.bf16.msra.mxu0 0
    %509 = vmatprep.subr.bf16.mxu0 0
    %510 = vmatpush1.bf16.msra.mxu0 0
    %511 = vmatprep.subr.bf16.mxu0 0
    %512 = vmatpush1.bf16.msra.mxu0 0
    %513 = vmatprep.subr.bf16.mxu0 0
    %514 = vmatpush1.bf16.msra.mxu0 0
    %515 = vmatprep.subr.bf16.mxu0 0
    %516 = vmatpush1.bf16.msra.mxu0 0
    %517 = vmatprep.subr.bf16.mxu0 0
    %518 = vmatpush1.bf16.msra.mxu0 0
    %519 = vmatprep.mubr.bf16.mxu0 0
    %520 = vmatmul.mubr.bf16.gmra.mrb[0].mxu0 %v476
    %v521 = vpop.f32.mrb[0].mxu0
    %v522 = vadd.f32 0.0, %v521
    %v523 = vpop.f32.mrb[0].mxu0
    %v524 = vpop.f32.mrb[0].mxu0
    %v525 = vadd.f32 0.0, %v524
    %v526 = vpop.f32.mrb[0].mxu0
    %527 = vmatprep.mubr.bf16.mxu0 0
    %528 = vmatmul.mubr.bf16.gmra.mrb[0].mxu0 %v479
    %v529 = vpop.f32.mrb[0].mxu0
    %v530 = vadd.f32 0.0, %v529
    %v531 = vpop.f32.mrb[0].mxu0
    %v532 = vpop.f32.mrb[0].mxu0
    %v533 = vadd.f32 0.0, %v532
    %v534 = vpop.f32.mrb[0].mxu0
    %535 = vmatprep.mubr.bf16.mxu0 0
    %536 = vmatmul.mubr.bf16.gmra.mrb[0].mxu0 %v482
    %v537 = vpop.f32.mrb[0].mxu0
    %v538 = vadd.f32 0.0, %v537
    %v539 = vpop.f32.mrb[0].mxu0
    %v540 = vpop.f32.mrb[0].mxu0
    %v541 = vpop.f32.mrb[0].mxu0
    %542 = vdwg.mxu0
    %v543 = vadd.f32 %v454, %v522
    %v544 = vadd.f32 %v455, %v525
    %v545 = vadd.f32 %v456, %v530
    %v546 = vadd.f32 %v457, %v533
    %v547 = vadd.f32 %v458, %v538
    %v548 = vpack.c.bf16 %v544, %v543
    %v549 = vpack.c.bf16 %v546, %v545
    %v550 = vpack.c.bf16 %v547, %v547
    %v552 = vsel %vm332, %v550, 0
    %554 = vmatprep.subr.bf16.mxu0 0
    %555 = vmatpush1.bf16.msra.mxu0 %v548
    %556 = vmatprep.subr.bf16.mxu0 0
    %557 = vmatpush1.bf16.msra.mxu0 %v549
    %558 = vmatprep.subr.bf16.mxu0 0
    %559 = vmatpush1.bf16.msra.mxu0 %v552
    %560 = vmatprep.subr.bf16.mxu0 0
    %561 = vmatpush1.bf16.msra.mxu0 0
    %562 = vmatprep.subr.bf16.mxu0 0
    %563 = vmatpush1.bf16.msra.mxu0 0
    %564 = vmatprep.subr.bf16.mxu0 0
    %565 = vmatpush1.bf16.msra.mxu0 0
    %566 = vmatprep.subr.bf16.mxu0 0
    %567 = vmatpush1.bf16.msra.mxu0 0
    %568 = vmatprep.subr.bf16.mxu0 0
    %569 = vmatpush1.bf16.msra.mxu0 0
    %570 = vmatprep.subr.bf16.mxu0 0
    %571 = vmatpush1.bf16.msra.mxu0 0
    %572 = vmatprep.subr.bf16.mxu0 0
    %573 = vmatpush1.bf16.msra.mxu0 0
    %574 = vmatprep.subr.bf16.mxu0 0
    %575 = vmatpush1.bf16.msra.mxu0 0
    %576 = vmatprep.subr.bf16.mxu0 0
    %577 = vmatpush1.bf16.msra.mxu0 0
    %578 = vmatprep.subr.bf16.mxu0 0
    %579 = vmatpush1.bf16.msra.mxu0 0
    %580 = vmatprep.subr.bf16.mxu0 0
    %581 = vmatpush1.bf16.msra.mxu0 0
    %582 = vmatprep.subr.bf16.mxu0 0
    %583 = vmatpush1.bf16.msra.mxu0 0
    %584 = vmatprep.subr.bf16.mxu0 0
    %585 = vmatpush1.bf16.msra.mxu0 0
    %586 = vmatprep.mubr.bf16.mxu0 0
    %587 = vmatmul.mubr.bf16.gmra.mrb[0].mxu0 %v318
    %v588 = vpop.f32.mrb[0].mxu0
    %v589 = vadd.f32 0.0, %v588
    %v590 = vpop.f32.mrb[0].mxu0
    %v591 = vpop.f32.mrb[0].mxu0
    %v592 = vadd.f32 0.0, %v591
    %v593 = vpop.f32.mrb[0].mxu0
    %594 = vmatprep.mubr.bf16.mxu0 0
    %595 = vmatmul.mubr.bf16.gmra.mrb[0].mxu0 %v321
    %v596 = vpop.f32.mrb[0].mxu0
    %v597 = vadd.f32 0.0, %v596
    %v598 = vpop.f32.mrb[0].mxu0
    %v599 = vpop.f32.mrb[0].mxu0
    %v600 = vadd.f32 0.0, %v599
    %v601 = vpop.f32.mrb[0].mxu0
    %602 = vmatprep.mubr.bf16.mxu0 0
    %603 = vmatmul.mubr.bf16.gmra.mrb[0].mxu0 %v324
    %v604 = vpop.f32.mrb[0].mxu0
    %v605 = vadd.f32 0.0, %v604
    %v606 = vpop.f32.mrb[0].mxu0
    %v607 = vpop.f32.mrb[0].mxu0
    %v608 = vadd.f32 0.0, %v607
    %v609 = vpop.f32.mrb[0].mxu0
    %610 = vmatprep.mubr.bf16.mxu0 0
    %611 = vmatmul.mubr.bf16.gmra.mrb[0].mxu0 %v327
    %v612 = vpop.f32.mrb[0].mxu0
    %v613 = vadd.f32 0.0, %v612
    %v614 = vpop.f32.mrb[0].mxu0
    %v615 = vpop.f32.mrb[0].mxu0
    %v616 = vadd.f32 0.0, %v615
    %v617 = vpop.f32.mrb[0].mxu0
    %618 = vmatprep.mubr.bf16.mxu0 0
    %619 = vmatmul.mubr.bf16.gmra.mrb[0].mxu0 %v330
    %v620 = vpop.f32.mrb[0].mxu0
    %v621 = vadd.f32 0.0, %v620
    %v622 = vpop.f32.mrb[0].mxu0
    %v623 = vpop.f32.mrb[0].mxu0
    %v624 = vadd.f32 0.0, %v623
    %v625 = vpop.f32.mrb[0].mxu0
    %626 = vdwg.mxu0
    %v627 = vadd.f32 %v589, %v221
    %v628 = vadd.f32 %v592, %v226
    %v629 = vadd.f32 %v597, %v231
    %v630 = vadd.f32 %v600, %v236
    %v631 = vadd.f32 %v605, %v241
    %v632 = vxor.u32 %v627, 2147483648
    %v633 = vxor.u32 %v628, 2147483648
    %v634 = vxor.u32 %v629, 2147483648
    %v635 = vxor.u32 %v630, 2147483648
    %v636 = vxor.u32 %v631, 2147483648
    %v637 = vmul.f32 %v632, 1.442695
    %v638 = vpow.pop %v637
    %v639 = vmul.f32 %v633, 1.442695
    %v640 = vpow.pop %v639
    %v641 = vmul.f32 %v634, 1.442695
    %v642 = vpow.pop %v641
    %v643 = vmul.f32 %v635, 1.442695
    %v644 = vpow.pop %v643
    %v645 = vmul.f32 %v636, 1.442695
    %v646 = vpow.pop %v645
    %v647 = vadd.f32 %v638, 1.0
    %v648 = vadd.f32 %v640, 1.0
    %v649 = vadd.f32 %v642, 1.0
    %v650 = vadd.f32 %v644, 1.0
    %v651 = vadd.f32 %v646, 1.0
    %v652 = vrcp.pop %v647
    %v653 = vmul.f32 1.0, %v652
    %v654 = vrcp.pop %v648
    %v655 = vmul.f32 1.0, %v654
    %v656 = vrcp.pop %v649
    %v657 = vmul.f32 1.0, %v656
    %v658 = vrcp.pop %v650
    %v659 = vmul.f32 1.0, %v658
    %v660 = vrcp.pop %v651
    %v661 = vmul.f32 1.0, %v660
    %v662 = vmul.f32 %v543, %v653
    %v663 = vmul.f32 %v544, %v655
    %v664 = vmul.f32 %v545, %v657
    %v665 = vmul.f32 %v546, %v659
    %v666 = vmul.f32 %v547, %v661
    %v667 = vadd.f32 %v543, %v608
    %v668 = vadd.f32 %v544, %v613
    %v669 = vadd.f32 %v545, %v616
    %v670 = vadd.f32 %v546, %v621
    %v671 = vadd.f32 %v547, %v624
    %v672 = vadd.f32 %v667, %v251
    %v673 = vadd.f32 %v668, %v256
    %v674 = vadd.f32 %v669, %v261
    %v675 = vadd.f32 %v670, %v266
    %v676 = vadd.f32 %v671, %v271
    %v677 = vpack.c.bf16 %v663, %v662
    %v678 = vpack.c.bf16 %v665, %v664
    %v679 = vpack.c.bf16 %v666, %v666
    %v681 = vsel %vm332, %v679, 0
    %683 = vmatprep.subr.bf16.mxu0 0
    %684 = vmatpush1.bf16.msra.mxu0 %v677
    %685 = vmatprep.subr.bf16.mxu0 0
    %686 = vmatpush1.bf16.msra.mxu0 %v678
    %687 = vmatprep.subr.bf16.mxu0 0
    %688 = vmatpush1.bf16.msra.mxu0 %v681
    %689 = vmatprep.subr.bf16.mxu0 0
    %690 = vmatpush1.bf16.msra.mxu0 0
    %691 = vmatprep.subr.bf16.mxu0 0
    %692 = vmatpush1.bf16.msra.mxu0 0
    %693 = vmatprep.subr.bf16.mxu0 0
    %694 = vmatpush1.bf16.msra.mxu0 0
    %695 = vmatprep.subr.bf16.mxu0 0
    %696 = vmatpush1.bf16.msra.mxu0 0
    %697 = vmatprep.subr.bf16.mxu0 0
    %698 = vmatpush1.bf16.msra.mxu0 0
    %699 = vmatprep.subr.bf16.mxu0 0
    %700 = vmatpush1.bf16.msra.mxu0 0
    %701 = vmatprep.subr.bf16.mxu0 0
    %702 = vmatpush1.bf16.msra.mxu0 0
    %703 = vmatprep.subr.bf16.mxu0 0
    %704 = vmatpush1.bf16.msra.mxu0 0
    %705 = vmatprep.subr.bf16.mxu0 0
    %706 = vmatpush1.bf16.msra.mxu0 0
    %707 = vmatprep.subr.bf16.mxu0 0
    %708 = vmatpush1.bf16.msra.mxu0 0
    %709 = vmatprep.subr.bf16.mxu0 0
    %710 = vmatpush1.bf16.msra.mxu0 0
    %711 = vmatprep.subr.bf16.mxu0 0
    %712 = vmatpush1.bf16.msra.mxu0 0
    %713 = vmatprep.subr.bf16.mxu0 0
    %714 = vmatpush1.bf16.msra.mxu0 0
    %715 = vmatprep.mubr.bf16.mxu0 0
    %716 = vmatmul.mubr.bf16.gmra.mrb[0].mxu0 %v476
    %v717 = vpop.f32.mrb[0].mxu0
    %v718 = vadd.f32 0.0, %v717
    %v719 = vpop.f32.mrb[0].mxu0
    %v720 = vpop.f32.mrb[0].mxu0
    %v721 = vadd.f32 0.0, %v720
    %v722 = vpop.f32.mrb[0].mxu0
    %723 = vmatprep.mubr.bf16.mxu0 0
    %724 = vmatmul.mubr.bf16.gmra.mrb[0].mxu0 %v479
    %v725 = vpop.f32.mrb[0].mxu0
    %v726 = vadd.f32 0.0, %v725
    %v727 = vpop.f32.mrb[0].mxu0
    %v728 = vpop.f32.mrb[0].mxu0
    %v729 = vadd.f32 0.0, %v728
    %v730 = vpop.f32.mrb[0].mxu0
    %731 = vmatprep.mubr.bf16.mxu0 0
    %732 = vmatmul.mubr.bf16.gmra.mrb[0].mxu0 %v482
    %v733 = vpop.f32.mrb[0].mxu0
    %v734 = vadd.f32 0.0, %v733
    %v735 = vpop.f32.mrb[0].mxu0
    %v736 = vpop.f32.mrb[0].mxu0
    %v737 = vpop.f32.mrb[0].mxu0
    %738 = vdwg.mxu0
    %v739 = vadd.f32 %v672, %v718
    %v740 = vadd.f32 %v673, %v721
    %v741 = vadd.f32 %v674, %v726
    %v742 = vadd.f32 %v675, %v729
    %v743 = vadd.f32 %v676, %v734
    %v744 = vpack.c.bf16 %v740, %v739
    %v745 = vpack.c.bf16 %v742, %v741
    %v746 = vpack.c.bf16 %v743, %v743
    %v748 = vsel %vm332, %v746, 0
    %750 = vmatprep.subr.bf16.mxu0 0
    %751 = vmatpush1.bf16.msra.mxu0 %v744
    %752 = vmatprep.subr.bf16.mxu0 0
    %753 = vmatpush1.bf16.msra.mxu0 %v745
    %754 = vmatprep.subr.bf16.mxu0 0
    %755 = vmatpush1.bf16.msra.mxu0 %v748
    %756 = vmatprep.subr.bf16.mxu0 0
    %757 = vmatpush1.bf16.msra.mxu0 0
    %758 = vmatprep.subr.bf16.mxu0 0
    %759 = vmatpush1.bf16.msra.mxu0 0
    %760 = vmatprep.subr.bf16.mxu0 0
    %761 = vmatpush1.bf16.msra.mxu0 0
    %762 = vmatprep.subr.bf16.mxu0 0
    %763 = vmatpush1.bf16.msra.mxu0 0
    %764 = vmatprep.subr.bf16.mxu0 0
    %765 = vmatpush1.bf16.msra.mxu0 0
    %766 = vmatprep.subr.bf16.mxu0 0
    %767 = vmatpush1.bf16.msra.mxu0 0
    %768 = vmatprep.subr.bf16.mxu0 0
    %769 = vmatpush1.bf16.msra.mxu0 0
    %770 = vmatprep.subr.bf16.mxu0 0
    %771 = vmatpush1.bf16.msra.mxu0 0
    %772 = vmatprep.subr.bf16.mxu0 0
    %773 = vmatpush1.bf16.msra.mxu0 0
    %774 = vmatprep.subr.bf16.mxu0 0
    %775 = vmatpush1.bf16.msra.mxu0 0
    %776 = vmatprep.subr.bf16.mxu0 0
    %777 = vmatpush1.bf16.msra.mxu0 0
    %778 = vmatprep.subr.bf16.mxu0 0
    %779 = vmatpush1.bf16.msra.mxu0 0
    %780 = vmatprep.subr.bf16.mxu0 0
    %781 = vmatpush1.bf16.msra.mxu0 0
    %782 = vmatprep.mubr.bf16.mxu0 0
    %783 = vmatmul.mubr.bf16.gmra.mrb[0].mxu0 %v318
    %v784 = vpop.f32.mrb[0].mxu0
    %v785 = vadd.f32 0.0, %v784
    %v786 = vpop.f32.mrb[0].mxu0
    %v787 = vpop.f32.mrb[0].mxu0
    %v788 = vadd.f32 0.0, %v787
    %v789 = vpop.f32.mrb[0].mxu0
    %790 = vmatprep.mubr.bf16.mxu0 0
    %791 = vmatmul.mubr.bf16.gmra.mrb[0].mxu0 %v321
    %v792 = vpop.f32.mrb[0].mxu0
    %v793 = vadd.f32 0.0, %v792
    %v794 = vpop.f32.mrb[0].mxu0
    %v795 = vpop.f32.mrb[0].mxu0
    %v796 = vadd.f32 0.0, %v795
    %v797 = vpop.f32.mrb[0].mxu0
    %798 = vmatprep.mubr.bf16.mxu0 0
    %799 = vmatmul.mubr.bf16.gmra.mrb[0].mxu0 %v324
    %v800 = vpop.f32.mrb[0].mxu0
    %v801 = vadd.f32 0.0, %v800
    %v802 = vpop.f32.mrb[0].mxu0
    %v803 = vpop.f32.mrb[0].mxu0
    %v804 = vadd.f32 0.0, %v803
    %v805 = vpop.f32.mrb[0].mxu0
    %806 = vmatprep.mubr.bf16.mxu0 0
    %807 = vmatmul.mubr.bf16.gmra.mrb[0].mxu0 %v327
    %v808 = vpop.f32.mrb[0].mxu0
    %v809 = vadd.f32 0.0, %v808
    %v810 = vpop.f32.mrb[0].mxu0
    %v811 = vpop.f32.mrb[0].mxu0
    %v812 = vadd.f32 0.0, %v811
    %v813 = vpop.f32.mrb[0].mxu0
    %814 = vmatprep.mubr.bf16.mxu0 0
    %815 = vmatmul.mubr.bf16.gmra.mrb[0].mxu0 %v330
    %v816 = vpop.f32.mrb[0].mxu0
    %v817 = vadd.f32 0.0, %v816
    %v818 = vpop.f32.mrb[0].mxu0
    %v819 = vpop.f32.mrb[0].mxu0
    %v820 = vadd.f32 0.0, %v819
    %v821 = vpop.f32.mrb[0].mxu0
    %822 = vdwg.mxu0
    %v823 = vadd.f32 %v785, %v221
    %v824 = vadd.f32 %v788, %v226
    %v825 = vadd.f32 %v793, %v231
    %v826 = vadd.f32 %v796, %v236
    %v827 = vadd.f32 %v801, %v241
    %v828 = vxor.u32 %v823, 2147483648
    %v829 = vxor.u32 %v824, 2147483648
    %v830 = vxor.u32 %v825, 2147483648
    %v831 = vxor.u32 %v826, 2147483648
    %v832 = vxor.u32 %v827, 2147483648
    %v833 = vmul.f32 %v828, 1.442695
    %v834 = vpow.pop %v833
    %v835 = vmul.f32 %v829, 1.442695
    %v836 = vpow.pop %v835
    %v837 = vmul.f32 %v830, 1.442695
    %v838 = vpow.pop %v837
    %v839 = vmul.f32 %v831, 1.442695
    %v840 = vpow.pop %v839
    %v841 = vmul.f32 %v832, 1.442695
    %v842 = vpow.pop %v841
    %v843 = vadd.f32 %v834, 1.0
    %v844 = vadd.f32 %v836, 1.0
    %v845 = vadd.f32 %v838, 1.0
    %v846 = vadd.f32 %v840, 1.0
    %v847 = vadd.f32 %v842, 1.0
    %v848 = vrcp.pop %v843
    %v849 = vmul.f32 1.0, %v848
    %v850 = vrcp.pop %v844
    %v851 = vmul.f32 1.0, %v850
    %v852 = vrcp.pop %v845
    %v853 = vmul.f32 1.0, %v852
    %v854 = vrcp.pop %v846
    %v855 = vmul.f32 1.0, %v854
    %v856 = vrcp.pop %v847
    %v857 = vmul.f32 1.0, %v856
    %v858 = vmul.f32 %v739, %v849
    %v859 = vmul.f32 %v740, %v851
    %v860 = vmul.f32 %v741, %v853
    %v861 = vmul.f32 %v742, %v855
    %v862 = vmul.f32 %v743, %v857
    %v863 = vadd.f32 %v739, %v804
    %v864 = vadd.f32 %v740, %v809
    %v865 = vadd.f32 %v741, %v812
    %v866 = vadd.f32 %v742, %v817
    %v867 = vadd.f32 %v743, %v820
    %v868 = vadd.f32 %v863, %v251
    %v869 = vadd.f32 %v864, %v256
    %v870 = vadd.f32 %v865, %v261
    %v871 = vadd.f32 %v866, %v266
    %v872 = vadd.f32 %v867, %v271
    %v873 = vpack.c.bf16 %v859, %v858
    %v874 = vpack.c.bf16 %v861, %v860
    %v875 = vpack.c.bf16 %v862, %v862
    %v877 = vsel %vm332, %v875, 0
    %879 = vmatprep.subr.bf16.mxu0 0
    %880 = vmatpush1.bf16.msra.mxu0 %v873
    %881 = vmatprep.subr.bf16.mxu0 0
    %882 = vmatpush1.bf16.msra.mxu0 %v874
    %883 = vmatprep.subr.bf16.mxu0 0
    %884 = vmatpush1.bf16.msra.mxu0 %v877
    %885 = vmatprep.subr.bf16.mxu0 0
    %886 = vmatpush1.bf16.msra.mxu0 0
    %887 = vmatprep.subr.bf16.mxu0 0
    %888 = vmatpush1.bf16.msra.mxu0 0
    %889 = vmatprep.subr.bf16.mxu0 0
    %890 = vmatpush1.bf16.msra.mxu0 0
    %891 = vmatprep.subr.bf16.mxu0 0
    %892 = vmatpush1.bf16.msra.mxu0 0
    %893 = vmatprep.subr.bf16.mxu0 0
    %894 = vmatpush1.bf16.msra.mxu0 0
    %895 = vmatprep.subr.bf16.mxu0 0
    %896 = vmatpush1.bf16.msra.mxu0 0
    %897 = vmatprep.subr.bf16.mxu0 0
    %898 = vmatpush1.bf16.msra.mxu0 0
    %899 = vmatprep.subr.bf16.mxu0 0
    %900 = vmatpush1.bf16.msra.mxu0 0
    %901 = vmatprep.subr.bf16.mxu0 0
    %902 = vmatpush1.bf16.msra.mxu0 0
    %903 = vmatprep.subr.bf16.mxu0 0
    %904 = vmatpush1.bf16.msra.mxu0 0
    %905 = vmatprep.subr.bf16.mxu0 0
    %906 = vmatpush1.bf16.msra.mxu0 0
    %907 = vmatprep.subr.bf16.mxu0 0
    %908 = vmatpush1.bf16.msra.mxu0 0
    %909 = vmatprep.subr.bf16.mxu0 0
    %910 = vmatpush1.bf16.msra.mxu0 0
    %911 = vmatprep.mubr.bf16.mxu0 0
    %912 = vmatmul.mubr.bf16.gmra.mrb[0].mxu0 %v476
    %v913 = vpop.f32.mrb[0].mxu0
    %v914 = vadd.f32 0.0, %v913
    %v915 = vpop.f32.mrb[0].mxu0
    %v916 = vpop.f32.mrb[0].mxu0
    %v917 = vadd.f32 0.0, %v916
    %v918 = vpop.f32.mrb[0].mxu0
    %919 = vmatprep.mubr.bf16.mxu0 0
    %920 = vmatmul.mubr.bf16.gmra.mrb[0].mxu0 %v479
    %v921 = vpop.f32.mrb[0].mxu0
    %v922 = vadd.f32 0.0, %v921
    %v923 = vpop.f32.mrb[0].mxu0
    %v924 = vpop.f32.mrb[0].mxu0
    %v925 = vadd.f32 0.0, %v924
    %v926 = vpop.f32.mrb[0].mxu0
    %927 = vmatprep.mubr.bf16.mxu0 0
    %928 = vmatmul.mubr.bf16.gmra.mrb[0].mxu0 %v482
    %v929 = vpop.f32.mrb[0].mxu0
    %v930 = vadd.f32 0.0, %v929
    %v931 = vpop.f32.mrb[0].mxu0
    %v932 = vpop.f32.mrb[0].mxu0
    %v933 = vpop.f32.mrb[0].mxu0
    %934 = vdwg.mxu0
    %v935 = vadd.f32 %v868, %v914
    %v936 = vadd.f32 %v869, %v917
    %v937 = vadd.f32 %v870, %v922
    %v938 = vadd.f32 %v871, %v925
    %v939 = vadd.f32 %v872, %v930
    %v940 = vpack.c.bf16 %v936, %v935
    %v941 = vpack.c.bf16 %v938, %v937
    %v942 = vpack.c.bf16 %v939, %v939
    %v944 = vsel %vm332, %v942, 0
    %946 = vmatprep.subr.bf16.mxu0 0
    %947 = vmatpush1.bf16.msra.mxu0 %v940
    %948 = vmatprep.subr.bf16.mxu0 0
    %949 = vmatpush1.bf16.msra.mxu0 %v941
    %950 = vmatprep.subr.bf16.mxu0 0
    %951 = vmatpush1.bf16.msra.mxu0 %v944
    %952 = vmatprep.subr.bf16.mxu0 0
    %953 = vmatpush1.bf16.msra.mxu0 0
    %954 = vmatprep.subr.bf16.mxu0 0
    %955 = vmatpush1.bf16.msra.mxu0 0
    %956 = vmatprep.subr.bf16.mxu0 0
    %957 = vmatpush1.bf16.msra.mxu0 0
    %958 = vmatprep.subr.bf16.mxu0 0
    %959 = vmatpush1.bf16.msra.mxu0 0
    %960 = vmatprep.subr.bf16.mxu0 0
    %961 = vmatpush1.bf16.msra.mxu0 0
    %962 = vmatprep.subr.bf16.mxu0 0
    %963 = vmatpush1.bf16.msra.mxu0 0
    %964 = vmatprep.subr.bf16.mxu0 0
    %965 = vmatpush1.bf16.msra.mxu0 0
    %966 = vmatprep.subr.bf16.mxu0 0
    %967 = vmatpush1.bf16.msra.mxu0 0
    %968 = vmatprep.subr.bf16.mxu0 0
    %969 = vmatpush1.bf16.msra.mxu0 0
    %970 = vmatprep.subr.bf16.mxu0 0
    %971 = vmatpush1.bf16.msra.mxu0 0
    %972 = vmatprep.subr.bf16.mxu0 0
    %973 = vmatpush1.bf16.msra.mxu0 0
    %974 = vmatprep.subr.bf16.mxu0 0
    %975 = vmatpush1.bf16.msra.mxu0 0
    %976 = vmatprep.subr.bf16.mxu0 0
    %977 = vmatpush1.bf16.msra.mxu0 0
    %978 = vmatprep.mubr.bf16.mxu0 0
    %979 = vmatmul.mubr.bf16.gmra.mrb[0].mxu0 %v318
    %v980 = vpop.f32.mrb[0].mxu0
    %v981 = vadd.f32 0.0, %v980
    %v982 = vpop.f32.mrb[0].mxu0
    %v983 = vpop.f32.mrb[0].mxu0
    %v984 = vadd.f32 0.0, %v983
    %v985 = vpop.f32.mrb[0].mxu0
    %986 = vmatprep.mubr.bf16.mxu0 0
    %987 = vmatmul.mubr.bf16.gmra.mrb[0].mxu0 %v321
    %v988 = vpop.f32.mrb[0].mxu0
    %v989 = vadd.f32 0.0, %v988
    %v990 = vpop.f32.mrb[0].mxu0
    %v991 = vpop.f32.mrb[0].mxu0
    %v992 = vadd.f32 0.0, %v991
    %v993 = vpop.f32.mrb[0].mxu0
    %994 = vmatprep.mubr.bf16.mxu0 0
    %995 = vmatmul.mubr.bf16.gmra.mrb[0].mxu0 %v324
    %v996 = vpop.f32.mrb[0].mxu0
    %v997 = vadd.f32 0.0, %v996
    %v998 = vpop.f32.mrb[0].mxu0
    %v999 = vpop.f32.mrb[0].mxu0
    %v1000 = vadd.f32 0.0, %v999
    %v1001 = vpop.f32.mrb[0].mxu0
    %1002 = vmatprep.mubr.bf16.mxu0 0
    %1003 = vmatmul.mubr.bf16.gmra.mrb[0].mxu0 %v327
    %v1004 = vpop.f32.mrb[0].mxu0
    %v1005 = vadd.f32 0.0, %v1004
    %v1006 = vpop.f32.mrb[0].mxu0
    %v1007 = vpop.f32.mrb[0].mxu0
    %v1008 = vadd.f32 0.0, %v1007
    %v1009 = vpop.f32.mrb[0].mxu0
    %1010 = vmatprep.mubr.bf16.mxu0 0
    %1011 = vmatmul.mubr.bf16.gmra.mrb[0].mxu0 %v330
    %v1012 = vpop.f32.mrb[0].mxu0
    %v1013 = vadd.f32 0.0, %v1012
    %v1014 = vpop.f32.mrb[0].mxu0
    %v1015 = vpop.f32.mrb[0].mxu0
    %v1016 = vadd.f32 0.0, %v1015
    %v1017 = vpop.f32.mrb[0].mxu0
    %1018 = vdwg.mxu0
    %v1019 = vadd.f32 %v981, %v221
    %v1020 = vadd.f32 %v984, %v226
    %v1021 = vadd.f32 %v989, %v231
    %v1022 = vadd.f32 %v992, %v236
    %v1023 = vadd.f32 %v997, %v241
    %v1024 = vxor.u32 %v1019, 2147483648
    %v1025 = vxor.u32 %v1020, 2147483648
    %v1026 = vxor.u32 %v1021, 2147483648
    %v1027 = vxor.u32 %v1022, 2147483648
    %v1028 = vxor.u32 %v1023, 2147483648
    %v1029 = vmul.f32 %v1024, 1.442695
    %v1030 = vpow.pop %v1029
    %v1031 = vmul.f32 %v1025, 1.442695
    %v1032 = vpow.pop %v1031
    %v1033 = vmul.f32 %v1026, 1.442695
    %v1034 = vpow.pop %v1033
    %v1035 = vmul.f32 %v1027, 1.442695
    %v1036 = vpow.pop %v1035
    %v1037 = vmul.f32 %v1028, 1.442695
    %v1038 = vpow.pop %v1037
    %v1039 = vadd.f32 %v1030, 1.0
    %v1040 = vadd.f32 %v1032, 1.0
    %v1041 = vadd.f32 %v1034, 1.0
    %v1042 = vadd.f32 %v1036, 1.0
    %v1043 = vadd.f32 %v1038, 1.0
    %v1044 = vrcp.pop %v1039
    %v1045 = vmul.f32 1.0, %v1044
    %v1046 = vrcp.pop %v1040
    %v1047 = vmul.f32 1.0, %v1046
    %v1048 = vrcp.pop %v1041
    %v1049 = vmul.f32 1.0, %v1048
    %v1050 = vrcp.pop %v1042
    %v1051 = vmul.f32 1.0, %v1050
    %v1052 = vrcp.pop %v1043
    %v1053 = vmul.f32 1.0, %v1052
    %v1054 = vmul.f32 %v935, %v1045
    %v1055 = vmul.f32 %v936, %v1047
    %v1056 = vmul.f32 %v937, %v1049
    %v1057 = vmul.f32 %v938, %v1051
    %v1058 = vmul.f32 %v939, %v1053
    %v1059 = vadd.f32 %v935, %v1000
    %v1060 = vadd.f32 %v936, %v1005
    %v1061 = vadd.f32 %v937, %v1008
    %v1062 = vadd.f32 %v938, %v1013
    %v1063 = vadd.f32 %v939, %v1016
    %v1064 = vadd.f32 %v1059, %v251
    %v1065 = vadd.f32 %v1060, %v256
    %v1066 = vadd.f32 %v1061, %v261
    %v1067 = vadd.f32 %v1062, %v266
    %v1068 = vadd.f32 %v1063, %v271
    %v1069 = vpack.c.bf16 %v1055, %v1054
    %v1070 = vpack.c.bf16 %v1057, %v1056
    %v1071 = vpack.c.bf16 %v1058, %v1058
    %v1073 = vsel %vm332, %v1071, 0
    %1075 = vmatprep.subr.bf16.mxu0 0
    %1076 = vmatpush1.bf16.msra.mxu0 %v1069
    %1077 = vmatprep.subr.bf16.mxu0 0
    %1078 = vmatpush1.bf16.msra.mxu0 %v1070
    %1079 = vmatprep.subr.bf16.mxu0 0
    %1080 = vmatpush1.bf16.msra.mxu0 %v1073
    %1081 = vmatprep.subr.bf16.mxu0 0
    %1082 = vmatpush1.bf16.msra.mxu0 0
    %1083 = vmatprep.subr.bf16.mxu0 0
    %1084 = vmatpush1.bf16.msra.mxu0 0
    %1085 = vmatprep.subr.bf16.mxu0 0
    %1086 = vmatpush1.bf16.msra.mxu0 0
    %1087 = vmatprep.subr.bf16.mxu0 0
    %1088 = vmatpush1.bf16.msra.mxu0 0
    %1089 = vmatprep.subr.bf16.mxu0 0
    %1090 = vmatpush1.bf16.msra.mxu0 0
    %1091 = vmatprep.subr.bf16.mxu0 0
    %1092 = vmatpush1.bf16.msra.mxu0 0
    %1093 = vmatprep.subr.bf16.mxu0 0
    %1094 = vmatpush1.bf16.msra.mxu0 0
    %1095 = vmatprep.subr.bf16.mxu0 0
    %1096 = vmatpush1.bf16.msra.mxu0 0
    %1097 = vmatprep.subr.bf16.mxu0 0
    %1098 = vmatpush1.bf16.msra.mxu0 0
    %1099 = vmatprep.subr.bf16.mxu0 0
    %1100 = vmatpush1.bf16.msra.mxu0 0
    %1101 = vmatprep.subr.bf16.mxu0 0
    %1102 = vmatpush1.bf16.msra.mxu0 0
    %1103 = vmatprep.subr.bf16.mxu0 0
    %1104 = vmatpush1.bf16.msra.mxu0 0
    %1105 = vmatprep.subr.bf16.mxu0 0
    %1106 = vmatpush1.bf16.msra.mxu0 0
    %1107 = vmatprep.mubr.bf16.mxu0 0
    %1108 = vmatmul.mubr.bf16.gmra.mrb[0].mxu0 %v476
    %v1109 = vpop.f32.mrb[0].mxu0
    %v1110 = vadd.f32 0.0, %v1109
    %v1111 = vpop.f32.mrb[0].mxu0
    %v1112 = vpop.f32.mrb[0].mxu0
    %v1113 = vadd.f32 0.0, %v1112
    %v1114 = vpop.f32.mrb[0].mxu0
    %1115 = vmatprep.mubr.bf16.mxu0 0
    %1116 = vmatmul.mubr.bf16.gmra.mrb[0].mxu0 %v479
    %v1117 = vpop.f32.mrb[0].mxu0
    %v1118 = vadd.f32 0.0, %v1117
    %v1119 = vpop.f32.mrb[0].mxu0
    %v1120 = vpop.f32.mrb[0].mxu0
    %v1121 = vadd.f32 0.0, %v1120
    %v1122 = vpop.f32.mrb[0].mxu0
    %1123 = vmatprep.mubr.bf16.mxu0 0
    %1124 = vmatmul.mubr.bf16.gmra.mrb[0].mxu0 %v482
    %v1125 = vpop.f32.mrb[0].mxu0
    %v1126 = vadd.f32 0.0, %v1125
    %v1127 = vpop.f32.mrb[0].mxu0
    %v1128 = vpop.f32.mrb[0].mxu0
    %v1129 = vpop.f32.mrb[0].mxu0
    %1130 = vdwg.mxu0
    %v1131 = vadd.f32 %v1064, %v1110
    %v1132 = vadd.f32 %v1065, %v1113
    %v1133 = vadd.f32 %v1066, %v1118
    %v1134 = vadd.f32 %v1067, %v1121
    %v1135 = vadd.f32 %v1068, %v1126
    %v1136 = vpack.c.bf16 %v1132, %v1131
    %v1137 = vpack.c.bf16 %v1134, %v1133
    %v1138 = vpack.c.bf16 %v1135, %v1135
    %v1140 = vsel %vm332, %v1138, 0
    %1142 = vmatprep.subr.bf16.mxu0 0
    %1143 = vmatpush1.bf16.msra.mxu0 %v1136
    %1144 = vmatprep.subr.bf16.mxu0 0
    %1145 = vmatpush1.bf16.msra.mxu0 %v1137
    %1146 = vmatprep.subr.bf16.mxu0 0
    %1147 = vmatpush1.bf16.msra.mxu0 %v1140
    %1148 = vmatprep.subr.bf16.mxu0 0
    %1149 = vmatpush1.bf16.msra.mxu0 0
    %1150 = vmatprep.subr.bf16.mxu0 0
    %1151 = vmatpush1.bf16.msra.mxu0 0
    %1152 = vmatprep.subr.bf16.mxu0 0
    %1153 = vmatpush1.bf16.msra.mxu0 0
    %1154 = vmatprep.subr.bf16.mxu0 0
    %1155 = vmatpush1.bf16.msra.mxu0 0
    %1156 = vmatprep.subr.bf16.mxu0 0
    %1157 = vmatpush1.bf16.msra.mxu0 0
    %1158 = vmatprep.subr.bf16.mxu0 0
    %1159 = vmatpush1.bf16.msra.mxu0 0
    %1160 = vmatprep.subr.bf16.mxu0 0
    %1161 = vmatpush1.bf16.msra.mxu0 0
    %1162 = vmatprep.subr.bf16.mxu0 0
    %1163 = vmatpush1.bf16.msra.mxu0 0
    %1164 = vmatprep.subr.bf16.mxu0 0
    %1165 = vmatpush1.bf16.msra.mxu0 0
    %1166 = vmatprep.subr.bf16.mxu0 0
    %1167 = vmatpush1.bf16.msra.mxu0 0
    %1168 = vmatprep.subr.bf16.mxu0 0
    %1169 = vmatpush1.bf16.msra.mxu0 0
    %1170 = vmatprep.subr.bf16.mxu0 0
    %1171 = vmatpush1.bf16.msra.mxu0 0
    %1172 = vmatprep.subr.bf16.mxu0 0
    %1173 = vmatpush1.bf16.msra.mxu0 0
    %1174 = vmatprep.mubr.bf16.mxu0 0
    %1175 = vmatmul.mubr.bf16.gmra.mrb[0].mxu0 %v318
    %v1176 = vpop.f32.mrb[0].mxu0
    %v1177 = vadd.f32 0.0, %v1176
    %v1178 = vpop.f32.mrb[0].mxu0
    %v1179 = vpop.f32.mrb[0].mxu0
    %v1180 = vadd.f32 0.0, %v1179
    %v1181 = vpop.f32.mrb[0].mxu0
    %1182 = vmatprep.mubr.bf16.mxu0 0
    %1183 = vmatmul.mubr.bf16.gmra.mrb[0].mxu0 %v321
    %v1184 = vpop.f32.mrb[0].mxu0
    %v1185 = vadd.f32 0.0, %v1184
    %v1186 = vpop.f32.mrb[0].mxu0
    %v1187 = vpop.f32.mrb[0].mxu0
    %v1188 = vadd.f32 0.0, %v1187
    %v1189 = vpop.f32.mrb[0].mxu0
    %1190 = vmatprep.mubr.bf16.mxu0 0
    %1191 = vmatmul.mubr.bf16.gmra.mrb[0].mxu0 %v324
    %v1192 = vpop.f32.mrb[0].mxu0
    %v1193 = vadd.f32 0.0, %v1192
    %v1194 = vpop.f32.mrb[0].mxu0
    %v1195 = vpop.f32.mrb[0].mxu0
    %v1196 = vadd.f32 0.0, %v1195
    %v1197 = vpop.f32.mrb[0].mxu0
    %1198 = vmatprep.mubr.bf16.mxu0 0
    %1199 = vmatmul.mubr.bf16.gmra.mrb[0].mxu0 %v327
    %v1200 = vpop.f32.mrb[0].mxu0
    %v1201 = vadd.f32 0.0, %v1200
    %v1202 = vpop.f32.mrb[0].mxu0
    %v1203 = vpop.f32.mrb[0].mxu0
    %v1204 = vadd.f32 0.0, %v1203
    %v1205 = vpop.f32.mrb[0].mxu0
    %1206 = vmatprep.mubr.bf16.mxu0 0
    %1207 = vmatmul.mubr.bf16.gmra.mrb[0].mxu0 %v330
    %v1208 = vpop.f32.mrb[0].mxu0
    %v1209 = vadd.f32 0.0, %v1208
    %v1210 = vpop.f32.mrb[0].mxu0
    %v1211 = vpop.f32.mrb[0].mxu0
    %v1212 = vadd.f32 0.0, %v1211
    %v1213 = vpop.f32.mrb[0].mxu0
    %1214 = vdwg.mxu0
    %v1215 = vadd.f32 %v1177, %v221
    %v1216 = vadd.f32 %v1180, %v226
    %v1217 = vadd.f32 %v1185, %v231
    %v1218 = vadd.f32 %v1188, %v236
    %v1219 = vadd.f32 %v1193, %v241
    %v1220 = vxor.u32 %v1215, 2147483648
    %v1221 = vxor.u32 %v1216, 2147483648
    %v1222 = vxor.u32 %v1217, 2147483648
    %v1223 = vxor.u32 %v1218, 2147483648
    %v1224 = vxor.u32 %v1219, 2147483648
    %v1225 = vmul.f32 %v1220, 1.442695
    %v1226 = vpow.pop %v1225
    %v1227 = vmul.f32 %v1221, 1.442695
    %v1228 = vpow.pop %v1227
    %v1229 = vmul.f32 %v1222, 1.442695
    %v1230 = vpow.pop %v1229
    %v1231 = vmul.f32 %v1223, 1.442695
    %v1232 = vpow.pop %v1231
    %v1233 = vmul.f32 %v1224, 1.442695
    %v1234 = vpow.pop %v1233
    %v1235 = vadd.f32 %v1226, 1.0
    %v1236 = vadd.f32 %v1228, 1.0
    %v1237 = vadd.f32 %v1230, 1.0
    %v1238 = vadd.f32 %v1232, 1.0
    %v1239 = vadd.f32 %v1234, 1.0
    %v1240 = vrcp.pop %v1235
    %v1241 = vmul.f32 1.0, %v1240
    %v1242 = vrcp.pop %v1236
    %v1243 = vmul.f32 1.0, %v1242
    %v1244 = vrcp.pop %v1237
    %v1245 = vmul.f32 1.0, %v1244
    %v1246 = vrcp.pop %v1238
    %v1247 = vmul.f32 1.0, %v1246
    %v1248 = vrcp.pop %v1239
    %v1249 = vmul.f32 1.0, %v1248
    %v1250 = vmul.f32 %v1131, %v1241
    %v1251 = vmul.f32 %v1132, %v1243
    %v1252 = vmul.f32 %v1133, %v1245
    %v1253 = vmul.f32 %v1134, %v1247
    %v1254 = vmul.f32 %v1135, %v1249
    %v1255 = vadd.f32 %v1131, %v1196
    %v1256 = vadd.f32 %v1132, %v1201
    %v1257 = vadd.f32 %v1133, %v1204
    %v1258 = vadd.f32 %v1134, %v1209
    %v1259 = vadd.f32 %v1135, %v1212
    %v1260 = vadd.f32 %v1255, %v251
    %v1261 = vadd.f32 %v1256, %v256
    %v1262 = vadd.f32 %v1257, %v261
    %v1263 = vadd.f32 %v1258, %v266
    %v1264 = vadd.f32 %v1259, %v271
    %v1265 = vpack.c.bf16 %v1251, %v1250
    %v1266 = vpack.c.bf16 %v1253, %v1252
    %v1267 = vpack.c.bf16 %v1254, %v1254
    %v1269 = vsel %vm332, %v1267, 0
    %1271 = vmatprep.subr.bf16.mxu0 0
    %1272 = vmatpush1.bf16.msra.mxu0 %v1265
    %1273 = vmatprep.subr.bf16.mxu0 0
    %1274 = vmatpush1.bf16.msra.mxu0 %v1266
    %1275 = vmatprep.subr.bf16.mxu0 0
    %1276 = vmatpush1.bf16.msra.mxu0 %v1269
    %1277 = vmatprep.subr.bf16.mxu0 0
    %1278 = vmatpush1.bf16.msra.mxu0 0
    %1279 = vmatprep.subr.bf16.mxu0 0
    %1280 = vmatpush1.bf16.msra.mxu0 0
    %1281 = vmatprep.subr.bf16.mxu0 0
    %1282 = vmatpush1.bf16.msra.mxu0 0
    %1283 = vmatprep.subr.bf16.mxu0 0
    %1284 = vmatpush1.bf16.msra.mxu0 0
    %1285 = vmatprep.subr.bf16.mxu0 0
    %1286 = vmatpush1.bf16.msra.mxu0 0
    %1287 = vmatprep.subr.bf16.mxu0 0
    %1288 = vmatpush1.bf16.msra.mxu0 0
    %1289 = vmatprep.subr.bf16.mxu0 0
    %1290 = vmatpush1.bf16.msra.mxu0 0
    %1291 = vmatprep.subr.bf16.mxu0 0
    %1292 = vmatpush1.bf16.msra.mxu0 0
    %1293 = vmatprep.subr.bf16.mxu0 0
    %1294 = vmatpush1.bf16.msra.mxu0 0
    %1295 = vmatprep.subr.bf16.mxu0 0
    %1296 = vmatpush1.bf16.msra.mxu0 0
    %1297 = vmatprep.subr.bf16.mxu0 0
    %1298 = vmatpush1.bf16.msra.mxu0 0
    %1299 = vmatprep.subr.bf16.mxu0 0
    %1300 = vmatpush1.bf16.msra.mxu0 0
    %1301 = vmatprep.subr.bf16.mxu0 0
    %1302 = vmatpush1.bf16.msra.mxu0 0
    %1303 = vmatprep.mubr.bf16.mxu0 0
    %1304 = vmatmul.mubr.bf16.gmra.mrb[0].mxu0 %v476
    %v1305 = vpop.f32.mrb[0].mxu0
    %v1306 = vadd.f32 0.0, %v1305
    %v1307 = vpop.f32.mrb[0].mxu0
    %v1308 = vpop.f32.mrb[0].mxu0
    %v1309 = vadd.f32 0.0, %v1308
    %v1310 = vpop.f32.mrb[0].mxu0
    %1311 = vmatprep.mubr.bf16.mxu0 0
    %1312 = vmatmul.mubr.bf16.gmra.mrb[0].mxu0 %v479
    %v1313 = vpop.f32.mrb[0].mxu0
    %v1314 = vadd.f32 0.0, %v1313
    %v1315 = vpop.f32.mrb[0].mxu0
    %v1316 = vpop.f32.mrb[0].mxu0
    %v1317 = vadd.f32 0.0, %v1316
    %v1318 = vpop.f32.mrb[0].mxu0
    %1319 = vmatprep.mubr.bf16.mxu0 0
    %1320 = vmatmul.mubr.bf16.gmra.mrb[0].mxu0 %v482
    %v1321 = vpop.f32.mrb[0].mxu0
    %v1322 = vadd.f32 0.0, %v1321
    %v1323 = vpop.f32.mrb[0].mxu0
    %v1324 = vpop.f32.mrb[0].mxu0
    %v1325 = vpop.f32.mrb[0].mxu0
    %1326 = vdwg.mxu0
    %v1327 = vadd.f32 %v1260, %v1306
    %v1328 = vadd.f32 %v1261, %v1309
    %v1329 = vadd.f32 %v1262, %v1314
    %v1330 = vadd.f32 %v1263, %v1317
    %v1331 = vadd.f32 %v1264, %v1322
    %v1332 = vld [vmem:[%s6] sm:$0x1]
    %v1333 = vld [vmem:[#allocation2] sm:$0x1]
    %1335 = vset.pattern.permute.xlu0 0
    %1336 = vperm.xlu0 %1335, %v1333
    %v1337 = vpop.permute.xlu0 %1336
    %v1339 = vlaneseq
    %v1340 = vshrl.u32 %v1339, 7
    %v1341 = vsub.s32 0, %v1340
    %v1342 = vrot.slane %v1337, %v1341
    %v1344 = vsel %vm316, %v1332, 0
    %1346 = vmatprep.subr.mxu0 0.0
    %1347 = vmatpush1.msra.mxu0 %v1327
    %1348 = vmatprep.subr.mxu0 0.0
    %1349 = vmatpush1.msra.mxu0 %v1328
    %1350 = vmatprep.subr.mxu0 0.0
    %1351 = vmatpush1.msra.mxu0 %v1329
    %1352 = vmatprep.subr.mxu0 0.0
    %1353 = vmatpush1.msra.mxu0 %v1330
    %1354 = vmatprep.subr.mxu0 0.0
    %1355 = vmatpush1.msra.mxu0 %v1331
    %1356 = vmatprep.subr.mxu0 0.0
    %1357 = vmatpush1.msra.mxu0 0.0
    %1358 = vmatprep.subr.mxu0 0.0
    %1359 = vmatpush1.msra.mxu0 0.0
    %1360 = vmatprep.subr.mxu0 0.0
    %1361 = vmatpush1.msra.mxu0 0.0
    %1362 = vmatprep.subr.mxu0 0.0
    %1363 = vmatpush1.msra.mxu0 0.0
    %1364 = vmatprep.subr.mxu0 0.0
    %1365 = vmatpush1.msra.mxu0 0.0
    %1366 = vmatprep.subr.mxu0 0.0
    %1367 = vmatpush1.msra.mxu0 0.0
    %1368 = vmatprep.subr.mxu0 0.0
    %1369 = vmatpush1.msra.mxu0 0.0
    %1370 = vmatprep.subr.mxu0 0.0
    %1371 = vmatpush1.msra.mxu0 0.0
    %1372 = vmatprep.subr.mxu0 0.0
    %1373 = vmatpush1.msra.mxu0 0.0
    %1374 = vmatprep.subr.mxu0 0.0
    %1375 = vmatpush1.msra.mxu0 0.0
    %1376 = vmatprep.subr.mxu0 0.0
    %1377 = vmatpush1.msra.mxu0 0.0
    %1378 = vmatprep.subr.mxu0 0.0
    %1379 = vmatpush1.msra.mxu0 0.0
    %1380 = vmatprep.subr.mxu0 0.0
    %1381 = vmatpush1.msra.mxu0 0.0
    %1382 = vmatprep.subr.mxu0 0.0
    %1383 = vmatpush1.msra.mxu0 0.0
    %1384 = vmatprep.subr.mxu0 0.0
    %1385 = vmatpush1.msra.mxu0 0.0
    %1386 = vmatprep.subr.mxu0 0.0
    %1387 = vmatpush1.msra.mxu0 0.0
    %1388 = vmatprep.subr.mxu0 0.0
    %1389 = vmatpush1.msra.mxu0 0.0
    %1390 = vmatprep.subr.mxu0 0.0
    %1391 = vmatpush1.msra.mxu0 0.0
    %1392 = vmatprep.subr.mxu0 0.0
    %1393 = vmatpush1.msra.mxu0 0.0
    %1394 = vmatprep.subr.mxu0 0.0
    %1395 = vmatpush1.msra.mxu0 0.0
    %1396 = vmatprep.subr.mxu0 0.0
    %1397 = vmatpush1.msra.mxu0 0.0
    %1398 = vmatprep.subr.mxu0 0.0
    %1399 = vmatpush1.msra.mxu0 0.0
    %1400 = vmatprep.subr.mxu0 0.0
    %1401 = vmatpush1.msra.mxu0 0.0
    %1402 = vmatprep.subr.mxu0 0.0
    %1403 = vmatpush1.msra.mxu0 0.0
    %1404 = vmatprep.subr.mxu0 0.0
    %1405 = vmatpush1.msra.mxu0 0.0
    %1406 = vmatprep.subr.mxu0 0.0
    %1407 = vmatpush1.msra.mxu0 0.0
    %1408 = vmatprep.subr.mxu0 0.0
    %1409 = vmatpush1.msra.mxu0 0.0
    %1410 = vmatprep.mubr.f32.mxu0 0.0
    %1411 = vmatmul.mubr.f32.gmra.mrb[0].mxu0 %v1344
    %v1412 = vpop.f32.mrb[0].mxu0
    %v1413 = vadd.f32 %v1342, %v1412
    %v1414 = vpop.f32.mrb[0].mxu0
    %1415 = vdwg.mxu0
    %1416 = vst [vmem:[#allocation3] sm:$0x1] %v1413
    // Predicated region
    $region34: #{tpu_custom_call.1} parent=1 // pred_check
      _
    $region35: #{tpu_custom_call.1} parent=1 // pred_check_branch
      %1418 = sbr.rel (0) target = $region37
    $region36: #{tpu_custom_call.1} parent=1 // pred_region
      %s1420 = ssub.s32 16, 16
      %1421 = vsyncadd [#allocation4], %s1420
      %s1423 = sshll.u32 [#allocation3], 4
      %s1424 = int_to_ptr.vmem [resolvable:$true] %s1423
      %1426 = dma.vmem_to_hbm [thread:$0]  %s1424, 16, %s8, [#allocation4]
    $region37: #{tpu_custom_call.1} parent=1 // pred_fallthru
      _
    // Predicated region
    $region38: #{tpu_custom_call.1} parent=1 // pred_check
      _
    $region39: #{tpu_custom_call.1} parent=1 // pred_check_branch
      %1428 = sbr.rel (0) target = $region41
    $region40: #{tpu_custom_call.1} parent=1 // pred_region
      %1429 = dma.done [#allocation4], 16
    $region41: #{tpu_custom_call.1} parent=1 // pred_fallthru
      _
    %1430 = vsyncpa [#allocation4], 1

</llo_original>
